<compile_context>
chip_gen: v5e
topology: v5e:2x2
jax: 0.10.0
libtpu: 0.0.40
codegen_flags: <defaults>
</compile_context>

<pallas_src>
import functools

import jax
import jax.numpy as jnp
from jax.experimental import pallas as pl
from jax.experimental.pallas import tpu as pltpu

N_EMBD = 384          # from the module
BLOCK_SIZE = 256      # max sequence length; T <= BLOCK_SIZE
DROPOUT_P = 0.2


def head_kernel(*refs, head_size, dropout_p, apply_dropout):
    if apply_dropout:
        x_ref, w_ref, rnd_ref, o_ref = refs
    else:
        x_ref, w_ref, o_ref = refs
        rnd_ref = None

    BB, T, C = x_ref.shape
    H = head_size

    # --- Fused QKV projection: one wide matmul with M = BB*T rows. ----------
    x2d = x_ref[...].reshape(BB * T, C)          # bf16 (leading-dim merge only)
    w = w_ref[...]                               # (C, 3H) bf16, Wq pre-scaled
    qkv = jnp.dot(x2d, w, preferred_element_type=jnp.float32)   # (BB*T, 3H) f32

    q = qkv[:, 0 * H:1 * H].reshape(BB, T, H).astype(jnp.bfloat16)
    k = qkv[:, 1 * H:2 * H].reshape(BB, T, H).astype(jnp.bfloat16)
    v = qkv[:, 2 * H:3 * H].reshape(BB, T, H).astype(jnp.bfloat16)

    # --- Attention scores: batched NT contraction (no explicit transpose). ---
    wei = jnp.einsum('bqh,bkh->bqk', q, k,
                     preferred_element_type=jnp.float32)        # (BB, T, T)

    # Causal mask.  Large finite negative (not -inf) so a fully-masked /
    # padded row can never turn into NaN after softmax.
    row = jax.lax.broadcasted_iota(jnp.int32, (T, T), 0)
    col = jax.lax.broadcasted_iota(jnp.int32, (T, T), 1)
    wei = jnp.where(col <= row, wei, -1e30)

    # --- Softmax, with the dropout rescale folded into the reciprocal. -------
    m = jnp.max(wei, axis=-1, keepdims=True)
    e = jnp.exp(wei - m)
    s = jnp.sum(e, axis=-1, keepdims=True)
    inv = pl.reciprocal(s, approx=True)          # EUP slot (approx)
    if apply_dropout:
        inv = inv * (1.0 / (1.0 - dropout_p))    # fold 1/(1-p) — no extra (T,T) mul
    p_attn = e * inv

    if apply_dropout:
        # Keep-mask by pure integer compare on host-supplied random bits
        # (pltpu.prng_* has no interpret lowering; bits come in via DMA).
        bits = (rnd_ref[...] & jnp.uint32(0x7FFFFF)).astype(jnp.int32)
        thresh = jnp.int32(int(dropout_p * float(1 << 23)))
        p_attn = jnp.where(bits >= thresh, p_attn, 0.0)

    # --- Weighted sum of values. ---------------------------------------------
    out = jnp.einsum('bqk,bkh->bqh', p_attn.astype(jnp.bfloat16), v,
                     preferred_element_type=jnp.float32)        # (BB, T, H)
    o_ref[...] = out.astype(o_ref.dtype)


def _pick_block_batch(B, max_bb=8):
    """Largest divisor of B that is <= max_bb while keeping grid length >= 2
    when possible (so both v7x TensorCores get work)."""
    hi = min(max_bb, max(B // 2, 1))
    for bb in range(hi, 0, -1):
        if B % bb == 0:
            return bb
    return 1


def head_forward(x, wk, wq, wv, *, rng_key=None, apply_dropout=True,
                 dropout_p=DROPOUT_P, max_block_batch=8):
    """x: (B, T, C) f32; wk/wq/wv: (C, H) f32 (pre-transposed Linear weights)."""
    B, T, C = x.shape
    H = wk.shape[1]
    assert T <= BLOCK_SIZE and C == N_EMBD
    out_dtype = x.dtype

    BB = _pick_block_batch(B, max_block_batch)
    grid = (B // BB,)

    # Fuse the three projections into one (C, 3H) weight; bake the 1/sqrt(H)
    # attention scale into Wq; ship everything to the MXU as bf16.
    w_qkv = jnp.concatenate(
        [wq * (H ** -0.5), wk, wv], axis=1).astype(jnp.bfloat16)   # (C, 3H)
    x_bf = x.astype(jnp.bfloat16)

    inputs = [x_bf, w_qkv]
    in_specs = [
        pl.BlockSpec((BB, T, C), lambda b: (b, 0, 0)),       # x tile
        pl.BlockSpec((C, 3 * H), lambda b: (0, 0)),          # fused weights
    ]
    if apply_dropout:
        if rng_key is None:
            rng_key = jax.random.PRNGKey(0)
        # TODO(synk): torch.nn.Dropout's exact RNG stream is not reproducible;
        # mask is Bernoulli(1-p) from jax.random bits instead.
        bits = jax.random.bits(rng_key, (B, T, T), dtype=jnp.uint32)
        inputs.append(bits)
        in_specs.append(pl.BlockSpec((BB, T, T), lambda b: (b, 0, 0)))

    kernel = functools.partial(
        head_kernel, head_size=H, dropout_p=dropout_p,
        apply_dropout=apply_dropout)

    return pl.pallas_call(
        kernel,
        out_shape=jax.ShapeDtypeStruct((B, T, H), out_dtype),
        grid=grid,
        in_specs=in_specs,
        out_specs=pl.BlockSpec((BB, T, H), lambda b: (b, 0, 0)),
        compiler_params=pltpu.CompilerParams(
            dimension_semantics=("parallel",)),
    )(*inputs)


def head_reference(x, wk, wq, wv):
    """Pure-JAX f32 reference (eval mode, no dropout), matching the module."""
    k = x @ wk
    q = x @ wq
    v = x @ wv
    H = k.shape[-1]
    T = x.shape[1]
    wei = jnp.einsum('bqh,bkh->bqk', q, k) * (H ** -0.5)
    mask = jnp.tril(jnp.ones((T, T), dtype=bool))
    wei = jnp.where(mask, wei, -jnp.inf)
    wei = jax.nn.softmax(wei, axis=-1)
    return jnp.einsum('bqk,bkh->bqh', wei, v)


if __name__ == "__main__":
    B, T, H = 8, 64, 64          # small shapes; C fixed by the module at 384
    C = N_EMBD

    key = jax.random.PRNGKey(0)
    kx, kk, kq, kv, kd = jax.random.split(key, 5)

    x = jax.random.normal(kx, (B, T, C), dtype=jnp.float32)

    # nn.Linear-style init U(-1/sqrt(C), 1/sqrt(C)), stored pre-transposed (C, H).
    bound = 1.0 / (C ** 0.5)
    wk = jax.random.uniform(kk, (C, H), jnp.float32, -bound, bound)
    wq = jax.random.uniform(kq, (C, H), jnp.float32, -bound, bound)
    wv = jax.random.uniform(kv, (C, H), jnp.float32, -bound, bound)

    # Eval-mode run: check against the pure-JAX reference (bf16 tolerance).
    out_eval = head_forward(x, wk, wq, wv, apply_dropout=False)
    out_eval = jax.block_until_ready(out_eval)
    ref = head_reference(x, wk, wq, wv)
    max_err = float(jnp.max(jnp.abs(out_eval - ref)))
    assert out_eval.shape == (B, T, H) and out_eval.dtype == jnp.float32
    assert max_err < 8e-2, f"mismatch vs reference: {max_err}"

    # Training-mode run (dropout active): exercise the full path.
    out_train = head_forward(x, wk, wq, wv, rng_key=kd, apply_dropout=True)
    out_train = jax.block_until_ready(out_train)
    assert out_train.shape == (B, T, H) and out_train.dtype == jnp.float32
    assert bool(jnp.all(jnp.isfinite(out_train)))

    print("KERNEL_OK")
</pallas_src>

<mosaic_0001>
module attributes {stable_mosaic.version = 11 : i64} {
  func.func @head_kernel(%arg0: i32, %arg1: memref<4x64x384xbf16, #tpu.memory_space<vmem>>, %arg2: memref<384x192xbf16, #tpu.memory_space<vmem>>, %arg3: memref<4x64x64xf32, #tpu.memory_space<vmem>>) attributes {dimension_semantics = [#tpu.dimension_semantics<parallel>], iteration_bounds = array<i64: 2>, scalar_prefetch = 0 : i64, scratch_operands = 0 : i64, tpu.core_type = #tpu.core_type<tc>, window_params = [{transform_indices = @transform_0, window_bounds = array<i64: 4, 64, 384>}, {pipeline_mode = #tpu.pipeline_mode<synchronous>, transform_indices = @transform_1, window_bounds = array<i64: 384, 192>}, {transform_indices = @transform_2, window_bounds = array<i64: 4, 64, 64>}]} {
    %c0 = arith.constant 0 : index
    %c0_0 = arith.constant 0 : index
    %c0_1 = arith.constant 0 : index
    %0 = vector.load %arg1[%c0, %c0_0, %c0_1] : memref<4x64x384xbf16, #tpu.memory_space<vmem>>, vector<4x64x384xbf16>
    %1 = vector.shape_cast %0 : vector<4x64x384xbf16> to vector<256x384xbf16>
    %c0_2 = arith.constant 0 : index
    %c0_3 = arith.constant 0 : index
    %2 = vector.load %arg2[%c0_2, %c0_3] : memref<384x192xbf16, #tpu.memory_space<vmem>>, vector<384x192xbf16>
    %cst = arith.constant dense<0.000000e+00> : vector<256x192xf32>
    %3 = tpu.matmul %1, %2, %cst {dimension_numbers = #tpu.dot_dimension_numbers<[1], [0], [0], [1], [0, 0, 1, 1], [], []>} : vector<256x384xbf16>, vector<384x192xbf16>, vector<256x192xf32> -> vector<256x192xf32>
    %4 = vector.extract_strided_slice %3 {offsets = [0, 0], sizes = [256, 64], strides = [1, 1]} : vector<256x192xf32> to vector<256x64xf32>
    %5 = vector.shape_cast %4 : vector<256x64xf32> to vector<4x64x64xf32>
    %6 = arith.truncf %5 : vector<4x64x64xf32> to vector<4x64x64xbf16>
    %7 = vector.extract_strided_slice %3 {offsets = [0, 64], sizes = [256, 64], strides = [1, 1]} : vector<256x192xf32> to vector<256x64xf32>
    %8 = vector.shape_cast %7 : vector<256x64xf32> to vector<4x64x64xf32>
    %9 = arith.truncf %8 : vector<4x64x64xf32> to vector<4x64x64xbf16>
    %10 = vector.extract_strided_slice %3 {offsets = [0, 128], sizes = [256, 64], strides = [1, 1]} : vector<256x192xf32> to vector<256x64xf32>
    %11 = vector.shape_cast %10 : vector<256x64xf32> to vector<4x64x64xf32>
    %12 = arith.truncf %11 : vector<4x64x64xf32> to vector<4x64x64xbf16>
    "tpu.trace_start"() <{level = 10 : i32, message = "bqh,bkh->bqk"}> : () -> ()
    %cst_4 = arith.constant dense<0.000000e+00> : vector<4x64x64xf32>
    %13 = tpu.matmul %6, %9, %cst_4 {dimension_numbers = #tpu.dot_dimension_numbers<[2], [2], [1], [1], [0, 0, 0, 1, 1, 1], [0], [0]>} : vector<4x64x64xbf16>, vector<4x64x64xbf16>, vector<4x64x64xf32> -> vector<4x64x64xf32>
    "tpu.trace_stop"() : () -> ()
    %14 = tpu.iota {dimensions = array<i32: 0>} : vector<64x64xi32>
    %15 = tpu.iota {dimensions = array<i32: 1>} : vector<64x64xi32>
    %16 = arith.cmpi sle, %15, %14 : vector<64x64xi32>
    %cst_5 = arith.constant -1.000000e+30 : f32
    %17 = vector.shape_cast %16 : vector<64x64xi1> to vector<1x64x64xi1>
    %18 = vector.broadcast %17 : vector<1x64x64xi1> to vector<4x64x64xi1>
    %19 = vector.broadcast %cst_5 : f32 to vector<4x64x64xf32>
    %20 = arith.select %18, %13, %19 : vector<4x64x64xi1>, vector<4x64x64xf32>
    %cst_6 = arith.constant dense<0xFF800000> : vector<4x64xf32>
    %21 = vector.multi_reduction <maximumf>, %20, %cst_6 [2] : vector<4x64x64xf32> to vector<4x64xf32>
    %22 = vector.shape_cast %21 : vector<4x64xf32> to vector<4x64x1xf32>
    %23 = vector.broadcast %22 : vector<4x64x1xf32> to vector<4x64x64xf32>
    %24 = arith.subf %20, %23 : vector<4x64x64xf32>
    %25 = math.exp %24 : vector<4x64x64xf32>
    %cst_7 = arith.constant dense<0.000000e+00> : vector<4x64xf32>
    %26 = vector.multi_reduction <add>, %25, %cst_7 [2] : vector<4x64x64xf32> to vector<4x64xf32>
    %27 = vector.shape_cast %26 : vector<4x64xf32> to vector<4x64x1xf32>
    %28 = tpu.reciprocal %27 {approx = true} : vector<4x64x1xf32> -> vector<4x64x1xf32>
    %29 = vector.broadcast %28 : vector<4x64x1xf32> to vector<4x64x64xf32>
    %30 = arith.mulf %25, %29 : vector<4x64x64xf32>
    %31 = arith.truncf %30 : vector<4x64x64xf32> to vector<4x64x64xbf16>
    "tpu.trace_start"() <{level = 10 : i32, message = "bqk,bkh->bqh"}> : () -> ()
    %cst_8 = arith.constant dense<0.000000e+00> : vector<4x64x64xf32>
    %32 = tpu.matmul %31, %12, %cst_8 {dimension_numbers = #tpu.dot_dimension_numbers<[2], [1], [1], [2], [0, 0, 0, 1, 1, 2], [0], [0]>} : vector<4x64x64xbf16>, vector<4x64x64xbf16>, vector<4x64x64xf32> -> vector<4x64x64xf32>
    "tpu.trace_stop"() : () -> ()
    %c0_9 = arith.constant 0 : index
    %c0_10 = arith.constant 0 : index
    %c0_11 = arith.constant 0 : index
    %33 = vector.load %arg3[%c0_9, %c0_10, %c0_11] : memref<4x64x64xf32, #tpu.memory_space<vmem>>, vector<4x64x64xf32>
    tpu.vector_store %arg3[%c0_9, %c0_10, %c0_11], %32 {strides = array<i32>} : memref<4x64x64xf32, #tpu.memory_space<vmem>>, vector<4x64x64xf32>,
    return
  }
  func.func @transform_0(%arg0: i32) -> (i32, i32, i32) {
    %c0_i32 = arith.constant 0 : i32
    %c0_i32_0 = arith.constant 0 : i32
    %c0_i32_1 = arith.constant 0 : i32
    return %arg0, %c0_i32, %c0_i32_0 : i32, i32, i32
  }
  func.func @transform_1(%arg0: i32) -> (i32, i32) {
    %c0_i32 = arith.constant 0 : i32
    %c0_i32_0 = arith.constant 0 : i32
    %c0_i32_1 = arith.constant 0 : i32
    return %c0_i32, %c0_i32_0 : i32, i32
  }
  func.func @transform_2(%arg0: i32) -> (i32, i32, i32) {
    %c0_i32 = arith.constant 0 : i32
    %c0_i32_0 = arith.constant 0 : i32
    %c0_i32_1 = arith.constant 0 : i32
    return %arg0, %c0_i32, %c0_i32_0 : i32, i32, i32
  }
}

</mosaic_0001>

<llo_original>
// kernel: tpu_custom_call.1
$region0: #{tpu_custom_call.1}
  #allocation0 [shape = 'u32[]', space=smem, size = 0x4, offset = 0x4, fixed_abs, tag = 'smem constant byte address 0x4 - core index']
  #allocation1 [shape = 'u32[72,128]{1,0:T(1,128)}', space=vmem, size = 0x9000, scoped, tag = 'internal scratch']
  %s0 = inlined_call_operand.hbm [shape: bf16[8,64,384], index: 0, kind: input, shape index: {}]
  %s1 = inlined_call_operand.vmem [shape: bf16[384,192], index: 1, kind: input, shape index: {}]
  %s2 = inlined_call_operand.hbm [shape: f32[8,64,64], index: 2, kind: output, shape index: {}]
  %s3 = sld [smem:[#allocation0]]
  $region45: #{tpu_custom_call.1} parent=0
    _
  %s5 = ssub.s32 1, %s3
  %s6 = scalar_select 0, %s5, %s3
  $region1: #{tpu_custom_call.1} parent=0
    #allocation2 [shape = 'u8[393216]{0}', space=vmem, size = 0x60000, scoped, tag = 'input window, operand 0']
    #allocation3 [shape = 's32[2]{0}', space=sflag, size = 0x8, scoped, tag = 'scoped memory for tpu_custom_call.1']
    #allocation4 [shape = 's32[2]{0}', space=sflag, size = 0x8, scoped, tag = 'scoped memory for tpu_custom_call.1']
    #allocation5 [shape = 'u8[262144]{0}', space=vmem, size = 0x40000, scoped, tag = 'output window, operand 0']
    %7 = vsyncpa [#allocation3], 0
    %s8 = scalar_lea.sflag [#allocation3], 1
    %9 = vsyncpa %s8, 0
    %10 = vsyncpa [#allocation4], 0
    %s11 = scalar_lea.sflag [#allocation4], 1
    %12 = vsyncpa %s11, 0
    loop: start=0, step=1, limit=4
    $region2: #{tpu_custom_call.1} parent=1 // loop_pre_header
      _
    $region3: #{tpu_custom_call.1} parent=1 // loop_header
      %s14 = sphi 0, %s18
      %p15 = scmp.ge.s32.totalorder %s14, 4
      %s24 = sphi 0, %s26
      %s27 = sphi 0, %s24
      %s28 = sphi 0, %s27
      %s44 = sphi 0, %s28
      %s48 = sphi 0, %s48
      %s50 = sphi 0, %s48
      %s51 = sphi 0, %s50
      %s65 = sphi 0, %s51
      %s71 = sphi 0, %s73
      %s74 = sphi 0, %s71
      %s75 = sphi 0, %s74
      %s91 = sphi 0, %s75
    $region4: #{tpu_custom_call.1} parent=1 // loop_header_branch
      %17 = sbr.rel (%p15) target = $region8
    $region5: #{tpu_custom_call.1} parent=1 // loop_body
      %s19 = ssub.s32 %s14, 1
      %s20 = ssub.s32 %s14, 2
      %s21 = sadd.s32 %s14, 1
      %s22 = ssub.s32 %s14, %s21
      %p23 = scmp.eq.s32.totalorder %s22, 0
      %s25 = sadd.s32 %s24, 1
      %s26 = scalar_select %p23, %s24, %s25
      %p29 = pneg %p23
      %p30 = scmp.eq.s32.totalorder %s14, 1
      %p31 = por %p29, %p30
      %p32 = scmp.ne.s32.totalorder %s24, %s27
      %p33 = scmp.eq.s32.totalorder %s14, 0
      %p34 = por %p32, %p33
      %p35 = scmp.ne.s32.totalorder %s24, %s27
      %p36 = scmp.eq.s32.totalorder %s19, 1
      %p37 = por %p35, %p36
      %p38 = scmp.ne.s32.totalorder %s27, %s28
      %p39 = scmp.eq.s32.totalorder %s19, 0
      %p40 = por %p38, %p39
      %p41 = scmp.ne.s32.totalorder %s27, %s28
      %p42 = scmp.eq.s32.totalorder %s20, 1
      %p43 = por %p41, %p42
      %p45 = scmp.ne.s32.totalorder %s28, %s44
      %p46 = scmp.eq.s32.totalorder %s20, 0
      %p47 = por %p45, %p46
      %s49 = sadd.s32 %s48, 1
      %p52 = scmp.eq.s32.totalorder %s14, 1
      %p53 = scmp.ne.s32.totalorder %s48, %s50
      %p54 = scmp.eq.s32.totalorder %s14, 0
      %p55 = por %p53, %p54
      %p56 = scmp.ne.s32.totalorder %s48, %s50
      %p57 = scmp.eq.s32.totalorder %s19, 1
      %p58 = por %p56, %p57
      %p59 = scmp.ne.s32.totalorder %s50, %s51
      %p60 = scmp.eq.s32.totalorder %s19, 0
      %p61 = por %p59, %p60
      %p62 = scmp.ne.s32.totalorder %s50, %s51
      %p63 = scmp.eq.s32.totalorder %s20, 1
      %p64 = por %p62, %p63
      %p66 = scmp.ne.s32.totalorder %s51, %s65
      %p67 = scmp.eq.s32.totalorder %s20, 0
      %p68 = por %p66, %p67
      %s69 = ssub.s32 %s14, %s21
      %p70 = scmp.eq.s32.totalorder %s69, 0
      %s72 = sadd.s32 %s71, 1
      %s73 = scalar_select %p70, %s71, %s72
      %p76 = pneg %p70
      %p77 = scmp.eq.s32.totalorder %s14, 1
      %p78 = por %p76, %p77
      %p79 = scmp.ne.s32.totalorder %s71, %s74
      %p80 = scmp.eq.s32.totalorder %s14, 0
      %p81 = por %p79, %p80
      %p82 = scmp.ne.s32.totalorder %s71, %s74
      %p83 = scmp.eq.s32.totalorder %s19, 1
      %p84 = por %p82, %p83
      %p85 = scmp.ne.s32.totalorder %s74, %s75
      %p86 = scmp.eq.s32.totalorder %s19, 0
      %p87 = por %p85, %p86
      %p88 = scmp.ne.s32.totalorder %s74, %s75
      %p89 = scmp.eq.s32.totalorder %s20, 1
      %p90 = por %p88, %p89
      %p92 = scmp.ne.s32.totalorder %s75, %s91
      %p93 = scmp.eq.s32.totalorder %s20, 0
      %p94 = por %p92, %p93
      %p95 = scmp.le.s32.totalorder 1, %s14
      %p96 = scmp.lt.s32.totalorder %s14, 3
      %p97 = pnand %p95, %p96
      %p98 = pneg %p97
      // Predicated region
      $region9: #{tpu_custom_call.1} parent=5 // pred_check
        _
      $region10: #{tpu_custom_call.1} parent=5 // pred_check_branch
        %100 = sbr.rel (%p97) target = $region12
      $region11: #{tpu_custom_call.1} parent=5 // pred_region
        %s101 = ssub.s32 %s14, 1
        // Predicated region
        $region13: #{tpu_custom_call.1} parent=11 // pred_check
          %p102 = pneg %p61
        $region14: #{tpu_custom_call.1} parent=11 // pred_check_branch
          %104 = sbr.rel (%p102) target = $region16
        $region15: #{tpu_custom_call.1} parent=11 // pred_region
          _
        $region16: #{tpu_custom_call.1} parent=11 // pred_fallthru
          _
      $region12: #{tpu_custom_call.1} parent=5 // pred_fallthru
        _
      %p105 = scmp.lt.s32.totalorder %s14, 2
      // Predicated region
      $region17: #{tpu_custom_call.1} parent=5 // pred_check
        %p106 = pneg %p105
      $region18: #{tpu_custom_call.1} parent=5 // pred_check_branch
        %108 = sbr.rel (%p106) target = $region20
      $region19: #{tpu_custom_call.1} parent=5 // pred_region
        // Predicated region
        $region21: #{tpu_custom_call.1} parent=19 // pred_check
          %p109 = pneg %p34
        $region22: #{tpu_custom_call.1} parent=19 // pred_check_branch
          %111 = sbr.rel (%p109) target = $region24
        $region23: #{tpu_custom_call.1} parent=19 // pred_region
          %s112 = sand.u32 %s24, 1
          %s113 = scalar_lea.sflag [#allocation3], %s112
          %s114 = sand.u32 %s24, 1
          %s115 = smul.addr %s114, 384
          %s116 = scalar_lea.vmem [#allocation2], %s115
          %s117 = smul.u32 4, %s14
          %119 = vsyncadd %s113, 0
          %s120 = smul.addr %s117, 24
          %s121 = smul.addr %s120, 4
          %s122 = scalar_lea.hbm %s0, %s121
          %s123 = sshll.u32 %s122, 4
          %s124 = int_to_ptr.hbm [resolvable:$true] %s123
          %s125 = sshll.u32 %s116, 4
          %s126 = int_to_ptr.vmem [resolvable:$true] %s125
          %131 = dma.hbm_to_vmem [thread:$0]  %s124, 6144, %s126, %s113, 192, 192, 12
        $region24: #{tpu_custom_call.1} parent=19 // pred_fallthru
          _
      $region20: #{tpu_custom_call.1} parent=5 // pred_fallthru
        _
      %p132 = scmp.le.s32.totalorder 1, %s14
      %p133 = scmp.lt.s32.totalorder %s14, 3
      %p134 = pnand %p132, %p133
      %p135 = pneg %p134
      // Predicated region
      $region25: #{tpu_custom_call.1} parent=5 // pred_check
        _
      $region26: #{tpu_custom_call.1} parent=5 // pred_check_branch
        %137 = sbr.rel (%p134) target = $region28
      $region27: #{tpu_custom_call.1} parent=5 // pred_region
        %s138 = ssub.s32 %s14, 1
        %s139 = sand.u32 %s27, 1
        %s140 = scalar_lea.sflag [#allocation3], %s139
        %s141 = sand.u32 %s27, 1
        %s142 = smul.addr %s141, 384
        %s143 = scalar_lea.vmem [#allocation2], %s142
        // Predicated region
        $region29: #{tpu_custom_call.1} parent=27 // pred_check
          %p144 = pneg %p40
        $region30: #{tpu_custom_call.1} parent=27 // pred_check_branch
          %146 = sbr.rel (%p144) target = $region32
        $region31: #{tpu_custom_call.1} parent=27 // pred_region
          %148 = dma.done %s140, 6144
        $region32: #{tpu_custom_call.1} parent=27 // pred_fallthru
          _
        %s149 = sand.u32 %s27, 1
        %s150 = scalar_lea.sflag [#allocation3], %s149
        %s151 = sand.u32 %s27, 1
        %s152 = smul.addr %s151, 384
        %s153 = scalar_lea.vmem [#allocation2], %s152
        %p154 = pneg %p40
        %p155 = pneg %p37
        %p156 = pneg %p61
        %p157 = pneg %p58
        %p158 = pneg %p87
        %p159 = pneg %p84
        %s160 = sand.u32 %s74, 1
        %s161 = scalar_lea.sflag [#allocation4], %s160
        %s162 = sand.u32 %s74, 1
        %s163 = smul.addr %s162, 256
        %s164 = scalar_lea.vmem [#allocation5], %s163
        %s165 = smul.u32 4, %s19
        %s166 = smul.u32 4, %s19
        %v168 = vld [vmem:[%s143] sm:$0xff]
        %v169 = vld [vmem:[%s143 + $0x8] sm:$0xf]
        %v170 = vld [vmem:[%s143 + $0xc] sm:$0xff]
        %v171 = vld [vmem:[%s143 + $0x14] sm:$0xf]
        %v172 = vld [vmem:[%s143 + $0x18] sm:$0xff]
        %v173 = vld [vmem:[%s143 + $0x20] sm:$0xf]
        %v174 = vld [vmem:[%s143 + $0x24] sm:$0xff]
        %v175 = vld [vmem:[%s143 + $0x2c] sm:$0xf]
        %v176 = vld [vmem:[%s143 + $0x30] sm:$0xff]
        %v177 = vld [vmem:[%s143 + $0x38] sm:$0xf]
        %v178 = vld [vmem:[%s143 + $0x3c] sm:$0xff]
        %v179 = vld [vmem:[%s143 + $0x44] sm:$0xf]
        %v180 = vld [vmem:[%s143 + $0x48] sm:$0xff]
        %v181 = vld [vmem:[%s143 + $0x50] sm:$0xf]
        %v182 = vld [vmem:[%s143 + $0x54] sm:$0xff]
        %v183 = vld [vmem:[%s143 + $0x5c] sm:$0xf]
        %v184 = vld [vmem:[%s143 + $0x60] sm:$0xff]
        %v185 = vld [vmem:[%s143 + $0x68] sm:$0xf]
        %v186 = vld [vmem:[%s143 + $0x6c] sm:$0xff]
        %v187 = vld [vmem:[%s143 + $0x74] sm:$0xf]
        %v188 = vld [vmem:[%s143 + $0x78] sm:$0xff]
        %v189 = vld [vmem:[%s143 + $0x80] sm:$0xf]
        %v190 = vld [vmem:[%s143 + $0x84] sm:$0xff]
        %v191 = vld [vmem:[%s143 + $0x8c] sm:$0xf]
        %v192 = vld [vmem:[%s143 + $0x90] sm:$0xff]
        %v193 = vld [vmem:[%s143 + $0x98] sm:$0xf]
        %v194 = vld [vmem:[%s143 + $0x9c] sm:$0xff]
        %v195 = vld [vmem:[%s143 + $0xa4] sm:$0xf]
        %v196 = vld [vmem:[%s143 + $0xa8] sm:$0xff]
        %v197 = vld [vmem:[%s143 + $0xb0] sm:$0xf]
        %v198 = vld [vmem:[%s143 + $0xb4] sm:$0xff]
        %v199 = vld [vmem:[%s143 + $0xbc] sm:$0xf]
        %v200 = vld [vmem:[%s143 + $0xc0] sm:$0xff]
        %v201 = vld [vmem:[%s143 + $0xc8] sm:$0xf]
        %v202 = vld [vmem:[%s143 + $0xcc] sm:$0xff]
        %v203 = vld [vmem:[%s143 + $0xd4] sm:$0xf]
        %v204 = vld [vmem:[%s143 + $0xd8] sm:$0xff]
        %v205 = vld [vmem:[%s143 + $0xe0] sm:$0xf]
        %v206 = vld [vmem:[%s143 + $0xe4] sm:$0xff]
        %v207 = vld [vmem:[%s143 + $0xec] sm:$0xf]
        %v208 = vld [vmem:[%s143 + $0xf0] sm:$0xff]
        %v209 = vld [vmem:[%s143 + $0xf8] sm:$0xf]
        %v210 = vld [vmem:[%s143 + $0xfc] sm:$0xff]
        %v211 = vld [vmem:[%s143 + $0x104] sm:$0xf]
        %v212 = vld [vmem:[%s143 + $0x108] sm:$0xff]
        %v213 = vld [vmem:[%s143 + $0x110] sm:$0xf]
        %v214 = vld [vmem:[%s143 + $0x114] sm:$0xff]
        %v215 = vld [vmem:[%s143 + $0x11c] sm:$0xf]
        %v216 = vld [vmem:[%s143 + $0x120] sm:$0xff]
        %v217 = vld [vmem:[%s143 + $0x128] sm:$0xf]
        %v218 = vld [vmem:[%s143 + $0x12c] sm:$0xff]
        %v219 = vld [vmem:[%s143 + $0x134] sm:$0xf]
        %v220 = vld [vmem:[%s143 + $0x138] sm:$0xff]
        %v221 = vld [vmem:[%s143 + $0x140] sm:$0xf]
        %v222 = vld [vmem:[%s143 + $0x144] sm:$0xff]
        %v223 = vld [vmem:[%s143 + $0x14c] sm:$0xf]
        %v224 = vld [vmem:[%s143 + $0x150] sm:$0xff]
        %v225 = vld [vmem:[%s143 + $0x158] sm:$0xf]
        %v226 = vld [vmem:[%s143 + $0x15c] sm:$0xff]
        %v227 = vld [vmem:[%s143 + $0x164] sm:$0xf]
        %v228 = vld [vmem:[%s143 + $0x168] sm:$0xff]
        %v229 = vld [vmem:[%s143 + $0x170] sm:$0xf]
        %v230 = vld [vmem:[%s143 + $0x174] sm:$0xff]
        %v231 = vld [vmem:[%s143 + $0x17c] sm:$0xf]
        %v232 = vld [vmem:[%s1] sm:$0xff]
        %v233 = vld [vmem:[%s1 + $0x8] sm:$0xff]
        %v234 = vld [vmem:[%s1 + $0x10] sm:$0xff]
        %v235 = vld [vmem:[%s1 + $0x18] sm:$0xff]
        %v236 = vld [vmem:[%s1 + $0x20] sm:$0xff]
        %v237 = vld [vmem:[%s1 + $0x28] sm:$0xff]
        %v238 = vld [vmem:[%s1 + $0x30] sm:$0xff]
        %v239 = vld [vmem:[%s1 + $0x38] sm:$0xff]
        %v240 = vld [vmem:[%s1 + $0x40] sm:$0xff]
        %v241 = vld [vmem:[%s1 + $0x48] sm:$0xff]
        %v242 = vld [vmem:[%s1 + $0x50] sm:$0xff]
        %v243 = vld [vmem:[%s1 + $0x58] sm:$0xff]
        %v244 = vld [vmem:[%s1 + $0x60] sm:$0xff]
        %v245 = vld [vmem:[%s1 + $0x68] sm:$0xff]
        %v246 = vld [vmem:[%s1 + $0x70] sm:$0xff]
        %v247 = vld [vmem:[%s1 + $0x78] sm:$0xff]
        %v248 = vld [vmem:[%s1 + $0x80] sm:$0xff]
        %v249 = vld [vmem:[%s1 + $0x88] sm:$0xff]
        %v250 = vld [vmem:[%s1 + $0x90] sm:$0xff]
        %v251 = vld [vmem:[%s1 + $0x98] sm:$0xff]
        %v252 = vld [vmem:[%s1 + $0xa0] sm:$0xff]
        %v253 = vld [vmem:[%s1 + $0xa8] sm:$0xff]
        %v254 = vld [vmem:[%s1 + $0xb0] sm:$0xff]
        %v255 = vld [vmem:[%s1 + $0xb8] sm:$0xff]
        %v256 = vld [vmem:[%s1 + $0xc0] sm:$0xff]
        %v257 = vld [vmem:[%s1 + $0xc8] sm:$0xff]
        %v258 = vld [vmem:[%s1 + $0xd0] sm:$0xff]
        %v259 = vld [vmem:[%s1 + $0xd8] sm:$0xff]
        %v260 = vld [vmem:[%s1 + $0xe0] sm:$0xff]
        %v261 = vld [vmem:[%s1 + $0xe8] sm:$0xff]
        %v262 = vld [vmem:[%s1 + $0xf0] sm:$0xff]
        %v263 = vld [vmem:[%s1 + $0xf8] sm:$0xff]
        %v264 = vld [vmem:[%s1 + $0x100] sm:$0xff]
        %v265 = vld [vmem:[%s1 + $0x108] sm:$0xff]
        %v266 = vld [vmem:[%s1 + $0x110] sm:$0xff]
        %v267 = vld [vmem:[%s1 + $0x118] sm:$0xff]
        %v268 = vld [vmem:[%s1 + $0x120] sm:$0xff]
        %v269 = vld [vmem:[%s1 + $0x128] sm:$0xff]
        %v270 = vld [vmem:[%s1 + $0x130] sm:$0xff]
        %v271 = vld [vmem:[%s1 + $0x138] sm:$0xff]
        %v272 = vld [vmem:[%s1 + $0x140] sm:$0xff]
        %v273 = vld [vmem:[%s1 + $0x148] sm:$0xff]
        %v274 = vld [vmem:[%s1 + $0x150] sm:$0xff]
        %v275 = vld [vmem:[%s1 + $0x158] sm:$0xff]
        %v276 = vld [vmem:[%s1 + $0x160] sm:$0xff]
        %v277 = vld [vmem:[%s1 + $0x168] sm:$0xff]
        %v278 = vld [vmem:[%s1 + $0x170] sm:$0xff]
        %v279 = vld [vmem:[%s1 + $0x178] sm:$0xff]
        %v344 = vunpack.c.l.b16 %v168
        %v345 = vunpack.c.h.b16 %v168
        %v346 = vunpack.c.l.b16 %v169
        %v347 = vunpack.c.l.b16 %v170
        %v348 = vunpack.c.h.b16 %v170
        %v349 = vunpack.c.l.b16 %v171
        %v350 = vunpack.c.l.b16 %v172
        %v351 = vunpack.c.h.b16 %v172
        %v352 = vunpack.c.l.b16 %v173
        %v353 = vunpack.c.l.b16 %v174
        %v354 = vunpack.c.h.b16 %v174
        %v355 = vunpack.c.l.b16 %v175
        %v356 = vunpack.c.l.b16 %v176
        %v357 = vunpack.c.h.b16 %v176
        %v358 = vunpack.c.l.b16 %v177
        %v359 = vunpack.c.l.b16 %v178
        %v360 = vunpack.c.h.b16 %v178
        %v361 = vunpack.c.l.b16 %v179
        %v362 = vunpack.c.l.b16 %v180
        %v363 = vunpack.c.h.b16 %v180
        %v364 = vunpack.c.l.b16 %v181
        %v365 = vunpack.c.l.b16 %v182
        %v366 = vunpack.c.h.b16 %v182
        %v367 = vunpack.c.l.b16 %v183
        %v368 = vunpack.c.l.b16 %v184
        %v369 = vunpack.c.h.b16 %v184
        %v370 = vunpack.c.l.b16 %v185
        %v371 = vunpack.c.l.b16 %v186
        %v372 = vunpack.c.h.b16 %v186
        %v373 = vunpack.c.l.b16 %v187
        %v374 = vunpack.c.l.b16 %v188
        %v375 = vunpack.c.h.b16 %v188
        %v376 = vunpack.c.l.b16 %v189
        %v377 = vunpack.c.l.b16 %v190
        %v378 = vunpack.c.h.b16 %v190
        %v379 = vunpack.c.l.b16 %v191
        %v380 = vunpack.c.l.b16 %v192
        %v381 = vunpack.c.h.b16 %v192
        %v382 = vunpack.c.l.b16 %v193
        %v383 = vunpack.c.l.b16 %v194
        %v384 = vunpack.c.h.b16 %v194
        %v385 = vunpack.c.l.b16 %v195
        %v386 = vunpack.c.l.b16 %v196
        %v387 = vunpack.c.h.b16 %v196
        %v388 = vunpack.c.l.b16 %v197
        %v389 = vunpack.c.l.b16 %v198
        %v390 = vunpack.c.h.b16 %v198
        %v391 = vunpack.c.l.b16 %v199
        %v392 = vunpack.c.l.b16 %v200
        %v393 = vunpack.c.h.b16 %v200
        %v394 = vunpack.c.l.b16 %v201
        %v395 = vunpack.c.l.b16 %v202
        %v396 = vunpack.c.h.b16 %v202
        %v397 = vunpack.c.l.b16 %v203
        %v398 = vunpack.c.l.b16 %v204
        %v399 = vunpack.c.h.b16 %v204
        %v400 = vunpack.c.l.b16 %v205
        %v401 = vunpack.c.l.b16 %v206
        %v402 = vunpack.c.h.b16 %v206
        %v403 = vunpack.c.l.b16 %v207
        %v404 = vunpack.c.l.b16 %v208
        %v405 = vunpack.c.h.b16 %v208
        %v406 = vunpack.c.l.b16 %v209
        %v407 = vunpack.c.l.b16 %v210
        %v408 = vunpack.c.h.b16 %v210
        %v409 = vunpack.c.l.b16 %v211
        %v410 = vunpack.c.l.b16 %v212
        %v411 = vunpack.c.h.b16 %v212
        %v412 = vunpack.c.l.b16 %v213
        %v413 = vunpack.c.l.b16 %v214
        %v414 = vunpack.c.h.b16 %v214
        %v415 = vunpack.c.l.b16 %v215
        %v416 = vunpack.c.l.b16 %v216
        %v417 = vunpack.c.h.b16 %v216
        %v418 = vunpack.c.l.b16 %v217
        %v419 = vunpack.c.l.b16 %v218
        %v420 = vunpack.c.h.b16 %v218
        %v421 = vunpack.c.l.b16 %v219
        %v422 = vunpack.c.l.b16 %v220
        %v423 = vunpack.c.h.b16 %v220
        %v424 = vunpack.c.l.b16 %v221
        %v425 = vunpack.c.l.b16 %v222
        %v426 = vunpack.c.h.b16 %v222
        %v427 = vunpack.c.l.b16 %v223
        %v428 = vunpack.c.l.b16 %v224
        %v429 = vunpack.c.h.b16 %v224
        %v430 = vunpack.c.l.b16 %v225
        %v431 = vunpack.c.l.b16 %v226
        %v432 = vunpack.c.h.b16 %v226
        %v433 = vunpack.c.l.b16 %v227
        %v434 = vunpack.c.l.b16 %v228
        %v435 = vunpack.c.h.b16 %v228
        %v436 = vunpack.c.l.b16 %v229
        %v437 = vunpack.c.l.b16 %v230
        %v438 = vunpack.c.h.b16 %v230
        %v439 = vunpack.c.l.b16 %v231
        %v440 = vpack.c.b16 %v347, %v344
        %v441 = vpack.c.b16 %v348, %v345
        %v442 = vpack.c.b16 %v349, %v346
        %v443 = vpack.c.b16 %v353, %v350
        %v444 = vpack.c.b16 %v354, %v351
        %v445 = vpack.c.b16 %v355, %v352
        %v446 = vpack.c.b16 %v359, %v356
        %v447 = vpack.c.b16 %v360, %v357
        %v448 = vpack.c.b16 %v361, %v358
        %v449 = vpack.c.b16 %v365, %v362
        %v450 = vpack.c.b16 %v366, %v363
        %v451 = vpack.c.b16 %v367, %v364
        %v452 = vpack.c.b16 %v371, %v368
        %v453 = vpack.c.b16 %v372, %v369
        %v454 = vpack.c.b16 %v373, %v370
        %v455 = vpack.c.b16 %v377, %v374
        %v456 = vpack.c.b16 %v378, %v375
        %v457 = vpack.c.b16 %v379, %v376
        %v458 = vpack.c.b16 %v383, %v380
        %v459 = vpack.c.b16 %v384, %v381
        %v460 = vpack.c.b16 %v385, %v382
        %v461 = vpack.c.b16 %v389, %v386
        %v462 = vpack.c.b16 %v390, %v387
        %v463 = vpack.c.b16 %v391, %v388
        %v464 = vpack.c.b16 %v395, %v392
        %v465 = vpack.c.b16 %v396, %v393
        %v466 = vpack.c.b16 %v397, %v394
        %v467 = vpack.c.b16 %v401, %v398
        %v468 = vpack.c.b16 %v402, %v399
        %v469 = vpack.c.b16 %v403, %v400
        %v470 = vpack.c.b16 %v407, %v404
        %v471 = vpack.c.b16 %v408, %v405
        %v472 = vpack.c.b16 %v409, %v406
        %v473 = vpack.c.b16 %v413, %v410
        %v474 = vpack.c.b16 %v414, %v411
        %v475 = vpack.c.b16 %v415, %v412
        %v476 = vpack.c.b16 %v419, %v416
        %v477 = vpack.c.b16 %v420, %v417
        %v478 = vpack.c.b16 %v421, %v418
        %v479 = vpack.c.b16 %v425, %v422
        %v480 = vpack.c.b16 %v426, %v423
        %v481 = vpack.c.b16 %v427, %v424
        %v482 = vpack.c.b16 %v431, %v428
        %v483 = vpack.c.b16 %v432, %v429
        %v484 = vpack.c.b16 %v433, %v430
        %v485 = vpack.c.b16 %v437, %v434
        %v486 = vpack.c.b16 %v438, %v435
        %v487 = vpack.c.b16 %v439, %v436
        %v584 = vunpack.c.l.b16 %v232
        %v585 = vunpack.c.h.b16 %v232
        %v586 = vunpack.c.l.b16 %v233
        %v587 = vunpack.c.h.b16 %v233
        %v588 = vunpack.c.l.b16 %v234
        %v589 = vunpack.c.h.b16 %v234
        %v590 = vunpack.c.l.b16 %v235
        %v591 = vunpack.c.h.b16 %v235
        %v592 = vunpack.c.l.b16 %v236
        %v593 = vunpack.c.h.b16 %v236
        %v594 = vunpack.c.l.b16 %v237
        %v595 = vunpack.c.h.b16 %v237
        %v596 = vunpack.c.l.b16 %v238
        %v597 = vunpack.c.h.b16 %v238
        %v598 = vunpack.c.l.b16 %v239
        %v599 = vunpack.c.h.b16 %v239
        %v600 = vunpack.c.l.b16 %v240
        %v601 = vunpack.c.h.b16 %v240
        %v602 = vunpack.c.l.b16 %v241
        %v603 = vunpack.c.h.b16 %v241
        %v604 = vunpack.c.l.b16 %v242
        %v605 = vunpack.c.h.b16 %v242
        %v606 = vunpack.c.l.b16 %v243
        %v607 = vunpack.c.h.b16 %v243
        %v608 = vunpack.c.l.b16 %v244
        %v609 = vunpack.c.h.b16 %v244
        %v610 = vunpack.c.l.b16 %v245
        %v611 = vunpack.c.h.b16 %v245
        %v612 = vunpack.c.l.b16 %v246
        %v613 = vunpack.c.h.b16 %v246
        %v614 = vunpack.c.l.b16 %v247
        %v615 = vunpack.c.h.b16 %v247
        %v616 = vunpack.c.l.b16 %v248
        %v617 = vunpack.c.h.b16 %v248
        %v618 = vunpack.c.l.b16 %v249
        %v619 = vunpack.c.h.b16 %v249
        %v620 = vunpack.c.l.b16 %v250
        %v621 = vunpack.c.h.b16 %v250
        %v622 = vunpack.c.l.b16 %v251
        %v623 = vunpack.c.h.b16 %v251
        %v624 = vunpack.c.l.b16 %v252
        %v625 = vunpack.c.h.b16 %v252
        %v626 = vunpack.c.l.b16 %v253
        %v627 = vunpack.c.h.b16 %v253
        %v628 = vunpack.c.l.b16 %v254
        %v629 = vunpack.c.h.b16 %v254
        %v630 = vunpack.c.l.b16 %v255
        %v631 = vunpack.c.h.b16 %v255
        %v632 = vunpack.c.l.b16 %v256
        %v633 = vunpack.c.h.b16 %v256
        %v634 = vunpack.c.l.b16 %v257
        %v635 = vunpack.c.h.b16 %v257
        %v636 = vunpack.c.l.b16 %v258
        %v637 = vunpack.c.h.b16 %v258
        %v638 = vunpack.c.l.b16 %v259
        %v639 = vunpack.c.h.b16 %v259
        %v640 = vunpack.c.l.b16 %v260
        %v641 = vunpack.c.h.b16 %v260
        %v642 = vunpack.c.l.b16 %v261
        %v643 = vunpack.c.h.b16 %v261
        %v644 = vunpack.c.l.b16 %v262
        %v645 = vunpack.c.h.b16 %v262
        %v646 = vunpack.c.l.b16 %v263
        %v647 = vunpack.c.h.b16 %v263
        %v648 = vunpack.c.l.b16 %v264
        %v649 = vunpack.c.h.b16 %v264
        %v650 = vunpack.c.l.b16 %v265
        %v651 = vunpack.c.h.b16 %v265
        %v652 = vunpack.c.l.b16 %v266
        %v653 = vunpack.c.h.b16 %v266
        %v654 = vunpack.c.l.b16 %v267
        %v655 = vunpack.c.h.b16 %v267
        %v656 = vunpack.c.l.b16 %v268
        %v657 = vunpack.c.h.b16 %v268
        %v658 = vunpack.c.l.b16 %v269
        %v659 = vunpack.c.h.b16 %v269
        %v660 = vunpack.c.l.b16 %v270
        %v661 = vunpack.c.h.b16 %v270
        %v662 = vunpack.c.l.b16 %v271
        %v663 = vunpack.c.h.b16 %v271
        %v664 = vunpack.c.l.b16 %v272
        %v665 = vunpack.c.h.b16 %v272
        %v666 = vunpack.c.l.b16 %v273
        %v667 = vunpack.c.h.b16 %v273
        %v668 = vunpack.c.l.b16 %v274
        %v669 = vunpack.c.h.b16 %v274
        %v670 = vunpack.c.l.b16 %v275
        %v671 = vunpack.c.h.b16 %v275
        %v672 = vunpack.c.l.b16 %v276
        %v673 = vunpack.c.h.b16 %v276
        %v674 = vunpack.c.l.b16 %v277
        %v675 = vunpack.c.h.b16 %v277
        %v676 = vunpack.c.l.b16 %v278
        %v677 = vunpack.c.h.b16 %v278
        %v678 = vunpack.c.l.b16 %v279
        %v679 = vunpack.c.h.b16 %v279
        %v680 = vpack.c.b16 %v586, %v584
        %v681 = vpack.c.b16 %v587, %v585
        %v682 = vpack.c.b16 %v590, %v588
        %v683 = vpack.c.b16 %v591, %v589
        %v684 = vpack.c.b16 %v594, %v592
        %v685 = vpack.c.b16 %v595, %v593
        %v686 = vpack.c.b16 %v598, %v596
        %v687 = vpack.c.b16 %v599, %v597
        %v688 = vpack.c.b16 %v602, %v600
        %v689 = vpack.c.b16 %v603, %v601
        %v690 = vpack.c.b16 %v606, %v604
        %v691 = vpack.c.b16 %v607, %v605
        %v692 = vpack.c.b16 %v610, %v608
        %v693 = vpack.c.b16 %v611, %v609
        %v694 = vpack.c.b16 %v614, %v612
        %v695 = vpack.c.b16 %v615, %v613
        %v696 = vpack.c.b16 %v618, %v616
        %v697 = vpack.c.b16 %v619, %v617
        %v698 = vpack.c.b16 %v622, %v620
        %v699 = vpack.c.b16 %v623, %v621
        %v700 = vpack.c.b16 %v626, %v624
        %v701 = vpack.c.b16 %v627, %v625
        %v702 = vpack.c.b16 %v630, %v628
        %v703 = vpack.c.b16 %v631, %v629
        %v704 = vpack.c.b16 %v634, %v632
        %v705 = vpack.c.b16 %v635, %v633
        %v706 = vpack.c.b16 %v638, %v636
        %v707 = vpack.c.b16 %v639, %v637
        %v708 = vpack.c.b16 %v642, %v640
        %v709 = vpack.c.b16 %v643, %v641
        %v710 = vpack.c.b16 %v646, %v644
        %v711 = vpack.c.b16 %v647, %v645
        %v712 = vpack.c.b16 %v650, %v648
        %v713 = vpack.c.b16 %v651, %v649
        %v714 = vpack.c.b16 %v654, %v652
        %v715 = vpack.c.b16 %v655, %v653
        %v716 = vpack.c.b16 %v658, %v656
        %v717 = vpack.c.b16 %v659, %v657
        %v718 = vpack.c.b16 %v662, %v660
        %v719 = vpack.c.b16 %v663, %v661
        %v720 = vpack.c.b16 %v666, %v664
        %v721 = vpack.c.b16 %v667, %v665
        %v722 = vpack.c.b16 %v670, %v668
        %v723 = vpack.c.b16 %v671, %v669
        %v724 = vpack.c.b16 %v674, %v672
        %v725 = vpack.c.b16 %v675, %v673
        %v726 = vpack.c.b16 %v678, %v676
        %v727 = vpack.c.b16 %v679, %v677
        %776 = vmatpush.bf16.msra.mxu0 %v694
        %777 = vmatpush.bf16.msra.mxu0 %v692
        %778 = vmatpush.bf16.msra.mxu0 %v690
        %779 = vmatpush.bf16.msra.mxu0 %v688
        %780 = vmatpush.bf16.msra.mxu0 %v686
        %781 = vmatpush.bf16.msra.mxu0 %v684
        %782 = vmatpush.bf16.msra.mxu0 %v682
        %783 = vmatpush.bf16.msra.mxu0 %v680
        %784 = vmatmul.bf16.gmra.mxu0 %v440
        %v785 = vpop.f32.mrf.mxu0
        %v786 = vadd.f32 0.0, %v785
        %v787 = vpop.f32.mrf.mxu0
        %v788 = vadd.f32 0.0, %v787
        %789 = vmatmul.bf16.gmra.mxu0 %v443
        %v790 = vpop.f32.mrf.mxu0
        %v791 = vadd.f32 0.0, %v790
        %v792 = vpop.f32.mrf.mxu0
        %v793 = vadd.f32 0.0, %v792
        %794 = vmatmul.bf16.gmra.mxu0 %v446
        %v795 = vpop.f32.mrf.mxu0
        %v796 = vadd.f32 0.0, %v795
        %v797 = vpop.f32.mrf.mxu0
        %v798 = vadd.f32 0.0, %v797
        %799 = vmatmul.bf16.gmra.mxu0 %v449
        %v800 = vpop.f32.mrf.mxu0
        %v801 = vadd.f32 0.0, %v800
        %v802 = vpop.f32.mrf.mxu0
        %v803 = vadd.f32 0.0, %v802
        %804 = vmatmul.bf16.gmra.mxu0 %v452
        %v805 = vpop.f32.mrf.mxu0
        %v806 = vadd.f32 0.0, %v805
        %v807 = vpop.f32.mrf.mxu0
        %v808 = vadd.f32 0.0, %v807
        %809 = vmatmul.bf16.gmra.mxu0 %v455
        %v810 = vpop.f32.mrf.mxu0
        %v811 = vadd.f32 0.0, %v810
        %v812 = vpop.f32.mrf.mxu0
        %v813 = vadd.f32 0.0, %v812
        %814 = vmatmul.bf16.gmra.mxu0 %v458
        %v815 = vpop.f32.mrf.mxu0
        %v816 = vadd.f32 0.0, %v815
        %v817 = vpop.f32.mrf.mxu0
        %v818 = vadd.f32 0.0, %v817
        %819 = vmatmul.bf16.gmra.mxu0 %v461
        %v820 = vpop.f32.mrf.mxu0
        %v821 = vadd.f32 0.0, %v820
        %v822 = vpop.f32.mrf.mxu0
        %v823 = vadd.f32 0.0, %v822
        %824 = vmatmul.bf16.gmra.mxu0 %v464
        %v825 = vpop.f32.mrf.mxu0
        %v826 = vadd.f32 0.0, %v825
        %v827 = vpop.f32.mrf.mxu0
        %v828 = vadd.f32 0.0, %v827
        %829 = vmatmul.bf16.gmra.mxu0 %v467
        %v830 = vpop.f32.mrf.mxu0
        %v831 = vadd.f32 0.0, %v830
        %v832 = vpop.f32.mrf.mxu0
        %v833 = vadd.f32 0.0, %v832
        %834 = vmatmul.bf16.gmra.mxu0 %v470
        %v835 = vpop.f32.mrf.mxu0
        %v836 = vadd.f32 0.0, %v835
        %v837 = vpop.f32.mrf.mxu0
        %v838 = vadd.f32 0.0, %v837
        %839 = vmatmul.bf16.gmra.mxu0 %v473
        %v840 = vpop.f32.mrf.mxu0
        %v841 = vadd.f32 0.0, %v840
        %v842 = vpop.f32.mrf.mxu0
        %v843 = vadd.f32 0.0, %v842
        %844 = vmatmul.bf16.gmra.mxu0 %v476
        %v845 = vpop.f32.mrf.mxu0
        %v846 = vadd.f32 0.0, %v845
        %v847 = vpop.f32.mrf.mxu0
        %v848 = vadd.f32 0.0, %v847
        %849 = vmatmul.bf16.gmra.mxu0 %v479
        %v850 = vpop.f32.mrf.mxu0
        %v851 = vadd.f32 0.0, %v850
        %v852 = vpop.f32.mrf.mxu0
        %v853 = vadd.f32 0.0, %v852
        %854 = vmatmul.bf16.gmra.mxu0 %v482
        %v855 = vpop.f32.mrf.mxu0
        %v856 = vadd.f32 0.0, %v855
        %v857 = vpop.f32.mrf.mxu0
        %v858 = vadd.f32 0.0, %v857
        %859 = vmatmul.bf16.gmra.mxu0 %v485
        %v860 = vpop.f32.mrf.mxu0
        %v861 = vadd.f32 0.0, %v860
        %v862 = vpop.f32.mrf.mxu0
        %v863 = vadd.f32 0.0, %v862
        %864 = vdwg.mxu0
        %865 = vmatpush.bf16.msra.mxu0 %v710
        %866 = vmatpush.bf16.msra.mxu0 %v708
        %867 = vmatpush.bf16.msra.mxu0 %v706
        %868 = vmatpush.bf16.msra.mxu0 %v704
        %869 = vmatpush.bf16.msra.mxu0 %v702
        %870 = vmatpush.bf16.msra.mxu0 %v700
        %871 = vmatpush.bf16.msra.mxu0 %v698
        %872 = vmatpush.bf16.msra.mxu0 %v696
        %873 = vmatmul.bf16.gmra.mxu0 %v441
        %v874 = vpop.f32.mrf.mxu0
        %v875 = vadd.f32 %v786, %v874
        %v876 = vpop.f32.mrf.mxu0
        %v877 = vadd.f32 %v788, %v876
        %878 = vmatmul.bf16.gmra.mxu0 %v444
        %v879 = vpop.f32.mrf.mxu0
        %v880 = vadd.f32 %v791, %v879
        %v881 = vpop.f32.mrf.mxu0
        %v882 = vadd.f32 %v793, %v881
        %883 = vmatmul.bf16.gmra.mxu0 %v447
        %v884 = vpop.f32.mrf.mxu0
        %v885 = vadd.f32 %v796, %v884
        %v886 = vpop.f32.mrf.mxu0
        %v887 = vadd.f32 %v798, %v886
        %888 = vmatmul.bf16.gmra.mxu0 %v450
        %v889 = vpop.f32.mrf.mxu0
        %v890 = vadd.f32 %v801, %v889
        %v891 = vpop.f32.mrf.mxu0
        %v892 = vadd.f32 %v803, %v891
        %893 = vmatmul.bf16.gmra.mxu0 %v453
        %v894 = vpop.f32.mrf.mxu0
        %v895 = vadd.f32 %v806, %v894
        %v896 = vpop.f32.mrf.mxu0
        %v897 = vadd.f32 %v808, %v896
        %898 = vmatmul.bf16.gmra.mxu0 %v456
        %v899 = vpop.f32.mrf.mxu0
        %v900 = vadd.f32 %v811, %v899
        %v901 = vpop.f32.mrf.mxu0
        %v902 = vadd.f32 %v813, %v901
        %903 = vmatmul.bf16.gmra.mxu0 %v459
        %v904 = vpop.f32.mrf.mxu0
        %v905 = vadd.f32 %v816, %v904
        %v906 = vpop.f32.mrf.mxu0
        %v907 = vadd.f32 %v818, %v906
        %908 = vmatmul.bf16.gmra.mxu0 %v462
        %v909 = vpop.f32.mrf.mxu0
        %v910 = vadd.f32 %v821, %v909
        %v911 = vpop.f32.mrf.mxu0
        %v912 = vadd.f32 %v823, %v911
        %913 = vmatmul.bf16.gmra.mxu0 %v465
        %v914 = vpop.f32.mrf.mxu0
        %v915 = vadd.f32 %v826, %v914
        %v916 = vpop.f32.mrf.mxu0
        %v917 = vadd.f32 %v828, %v916
        %918 = vmatmul.bf16.gmra.mxu0 %v468
        %v919 = vpop.f32.mrf.mxu0
        %v920 = vadd.f32 %v831, %v919
        %v921 = vpop.f32.mrf.mxu0
        %v922 = vadd.f32 %v833, %v921
        %923 = vmatmul.bf16.gmra.mxu0 %v471
        %v924 = vpop.f32.mrf.mxu0
        %v925 = vadd.f32 %v836, %v924
        %v926 = vpop.f32.mrf.mxu0
        %v927 = vadd.f32 %v838, %v926
        %928 = vmatmul.bf16.gmra.mxu0 %v474
        %v929 = vpop.f32.mrf.mxu0
        %v930 = vadd.f32 %v841, %v929
        %v931 = vpop.f32.mrf.mxu0
        %v932 = vadd.f32 %v843, %v931
        %933 = vmatmul.bf16.gmra.mxu0 %v477
        %v934 = vpop.f32.mrf.mxu0
        %v935 = vadd.f32 %v846, %v934
        %v936 = vpop.f32.mrf.mxu0
        %v937 = vadd.f32 %v848, %v936
        %938 = vmatmul.bf16.gmra.mxu0 %v480
        %v939 = vpop.f32.mrf.mxu0
        %v940 = vadd.f32 %v851, %v939
        %v941 = vpop.f32.mrf.mxu0
        %v942 = vadd.f32 %v853, %v941
        %943 = vmatmul.bf16.gmra.mxu0 %v483
        %v944 = vpop.f32.mrf.mxu0
        %v945 = vadd.f32 %v856, %v944
        %v946 = vpop.f32.mrf.mxu0
        %v947 = vadd.f32 %v858, %v946
        %948 = vmatmul.bf16.gmra.mxu0 %v486
        %v949 = vpop.f32.mrf.mxu0
        %v950 = vadd.f32 %v861, %v949
        %v951 = vpop.f32.mrf.mxu0
        %v952 = vadd.f32 %v863, %v951
        %953 = vdwg.mxu0
        %954 = vmatpush.bf16.msra.mxu0 %v726
        %955 = vmatpush.bf16.msra.mxu0 %v724
        %956 = vmatpush.bf16.msra.mxu0 %v722
        %957 = vmatpush.bf16.msra.mxu0 %v720
        %958 = vmatpush.bf16.msra.mxu0 %v718
        %959 = vmatpush.bf16.msra.mxu0 %v716
        %960 = vmatpush.bf16.msra.mxu0 %v714
        %961 = vmatpush.bf16.msra.mxu0 %v712
        %962 = vmatmul.bf16.gmra.mxu0 %v442
        %v963 = vpop.f32.mrf.mxu0
        %v964 = vadd.f32 %v875, %v963
        %v965 = vpop.f32.mrf.mxu0
        %v966 = vadd.f32 %v877, %v965
        %967 = vmatmul.bf16.gmra.mxu0 %v445
        %v968 = vpop.f32.mrf.mxu0
        %v969 = vadd.f32 %v880, %v968
        %v970 = vpop.f32.mrf.mxu0
        %v971 = vadd.f32 %v882, %v970
        %972 = vmatmul.bf16.gmra.mxu0 %v448
        %v973 = vpop.f32.mrf.mxu0
        %v974 = vadd.f32 %v885, %v973
        %v975 = vpop.f32.mrf.mxu0
        %v976 = vadd.f32 %v887, %v975
        %977 = vmatmul.bf16.gmra.mxu0 %v451
        %v978 = vpop.f32.mrf.mxu0
        %v979 = vadd.f32 %v890, %v978
        %v980 = vpop.f32.mrf.mxu0
        %v981 = vadd.f32 %v892, %v980
        %982 = vmatmul.bf16.gmra.mxu0 %v454
        %v983 = vpop.f32.mrf.mxu0
        %v984 = vadd.f32 %v895, %v983
        %v985 = vpop.f32.mrf.mxu0
        %v986 = vadd.f32 %v897, %v985
        %987 = vmatmul.bf16.gmra.mxu0 %v457
        %v988 = vpop.f32.mrf.mxu0
        %v989 = vadd.f32 %v900, %v988
        %v990 = vpop.f32.mrf.mxu0
        %v991 = vadd.f32 %v902, %v990
        %992 = vmatmul.bf16.gmra.mxu0 %v460
        %v993 = vpop.f32.mrf.mxu0
        %v994 = vadd.f32 %v905, %v993
        %v995 = vpop.f32.mrf.mxu0
        %v996 = vadd.f32 %v907, %v995
        %997 = vmatmul.bf16.gmra.mxu0 %v463
        %v998 = vpop.f32.mrf.mxu0
        %v999 = vadd.f32 %v910, %v998
        %v1000 = vpop.f32.mrf.mxu0
        %v1001 = vadd.f32 %v912, %v1000
        %1002 = vmatmul.bf16.gmra.mxu0 %v466
        %v1003 = vpop.f32.mrf.mxu0
        %v1004 = vadd.f32 %v915, %v1003
        %v1005 = vpop.f32.mrf.mxu0
        %v1006 = vadd.f32 %v917, %v1005
        %1007 = vmatmul.bf16.gmra.mxu0 %v469
        %v1008 = vpop.f32.mrf.mxu0
        %v1009 = vadd.f32 %v920, %v1008
        %v1010 = vpop.f32.mrf.mxu0
        %v1011 = vadd.f32 %v922, %v1010
        %1012 = vmatmul.bf16.gmra.mxu0 %v472
        %v1013 = vpop.f32.mrf.mxu0
        %v1014 = vadd.f32 %v925, %v1013
        %v1015 = vpop.f32.mrf.mxu0
        %v1016 = vadd.f32 %v927, %v1015
        %1017 = vmatmul.bf16.gmra.mxu0 %v475
        %v1018 = vpop.f32.mrf.mxu0
        %v1019 = vadd.f32 %v930, %v1018
        %v1020 = vpop.f32.mrf.mxu0
        %v1021 = vadd.f32 %v932, %v1020
        %1022 = vmatmul.bf16.gmra.mxu0 %v478
        %v1023 = vpop.f32.mrf.mxu0
        %v1024 = vadd.f32 %v935, %v1023
        %v1025 = vpop.f32.mrf.mxu0
        %v1026 = vadd.f32 %v937, %v1025
        %1027 = vmatmul.bf16.gmra.mxu0 %v481
        %v1028 = vpop.f32.mrf.mxu0
        %v1029 = vadd.f32 %v940, %v1028
        %v1030 = vpop.f32.mrf.mxu0
        %v1031 = vadd.f32 %v942, %v1030
        %1032 = vmatmul.bf16.gmra.mxu0 %v484
        %v1033 = vpop.f32.mrf.mxu0
        %v1034 = vadd.f32 %v945, %v1033
        %v1035 = vpop.f32.mrf.mxu0
        %v1036 = vadd.f32 %v947, %v1035
        %1037 = vmatmul.bf16.gmra.mxu0 %v487
        %v1038 = vpop.f32.mrf.mxu0
        %v1039 = vadd.f32 %v950, %v1038
        %v1040 = vpop.f32.mrf.mxu0
        %v1041 = vadd.f32 %v952, %v1040
        %1042 = vdwg.mxu0
        %1043 = vmatpush.bf16.msra.mxu0 %v695
        %1044 = vmatpush.bf16.msra.mxu0 %v693
        %1045 = vmatpush.bf16.msra.mxu0 %v691
        %1046 = vmatpush.bf16.msra.mxu0 %v689
        %1047 = vmatpush.bf16.msra.mxu0 %v687
        %1048 = vmatpush.bf16.msra.mxu0 %v685
        %1049 = vmatpush.bf16.msra.mxu0 %v683
        %1050 = vmatpush.bf16.msra.mxu0 %v681
        %1051 = vmatmul.bf16.gmra.mxu0 %v440
        %v1052 = vpop.f32.mrf.mxu0
        %v1053 = vadd.f32 0.0, %v1052
        %v1054 = vpop.f32.mrf.mxu0
        %v1055 = vadd.f32 0.0, %v1054
        %1056 = vmatmul.bf16.gmra.mxu0 %v443
        %v1057 = vpop.f32.mrf.mxu0
        %v1058 = vadd.f32 0.0, %v1057
        %v1059 = vpop.f32.mrf.mxu0
        %v1060 = vadd.f32 0.0, %v1059
        %1061 = vmatmul.bf16.gmra.mxu0 %v446
        %v1062 = vpop.f32.mrf.mxu0
        %v1063 = vadd.f32 0.0, %v1062
        %v1064 = vpop.f32.mrf.mxu0
        %v1065 = vadd.f32 0.0, %v1064
        %1066 = vmatmul.bf16.gmra.mxu0 %v449
        %v1067 = vpop.f32.mrf.mxu0
        %v1068 = vadd.f32 0.0, %v1067
        %v1069 = vpop.f32.mrf.mxu0
        %v1070 = vadd.f32 0.0, %v1069
        %1071 = vmatmul.bf16.gmra.mxu0 %v452
        %v1072 = vpop.f32.mrf.mxu0
        %v1073 = vadd.f32 0.0, %v1072
        %v1074 = vpop.f32.mrf.mxu0
        %v1075 = vadd.f32 0.0, %v1074
        %1076 = vmatmul.bf16.gmra.mxu0 %v455
        %v1077 = vpop.f32.mrf.mxu0
        %v1078 = vadd.f32 0.0, %v1077
        %v1079 = vpop.f32.mrf.mxu0
        %v1080 = vadd.f32 0.0, %v1079
        %1081 = vmatmul.bf16.gmra.mxu0 %v458
        %v1082 = vpop.f32.mrf.mxu0
        %v1083 = vadd.f32 0.0, %v1082
        %v1084 = vpop.f32.mrf.mxu0
        %v1085 = vadd.f32 0.0, %v1084
        %1086 = vmatmul.bf16.gmra.mxu0 %v461
        %v1087 = vpop.f32.mrf.mxu0
        %v1088 = vadd.f32 0.0, %v1087
        %v1089 = vpop.f32.mrf.mxu0
        %v1090 = vadd.f32 0.0, %v1089
        %1091 = vmatmul.bf16.gmra.mxu0 %v464
        %v1092 = vpop.f32.mrf.mxu0
        %v1093 = vadd.f32 0.0, %v1092
        %v1094 = vpop.f32.mrf.mxu0
        %v1095 = vadd.f32 0.0, %v1094
        %1096 = vmatmul.bf16.gmra.mxu0 %v467
        %v1097 = vpop.f32.mrf.mxu0
        %v1098 = vadd.f32 0.0, %v1097
        %v1099 = vpop.f32.mrf.mxu0
        %v1100 = vadd.f32 0.0, %v1099
        %1101 = vmatmul.bf16.gmra.mxu0 %v470
        %v1102 = vpop.f32.mrf.mxu0
        %v1103 = vadd.f32 0.0, %v1102
        %v1104 = vpop.f32.mrf.mxu0
        %v1105 = vadd.f32 0.0, %v1104
        %1106 = vmatmul.bf16.gmra.mxu0 %v473
        %v1107 = vpop.f32.mrf.mxu0
        %v1108 = vadd.f32 0.0, %v1107
        %v1109 = vpop.f32.mrf.mxu0
        %v1110 = vadd.f32 0.0, %v1109
        %1111 = vmatmul.bf16.gmra.mxu0 %v476
        %v1112 = vpop.f32.mrf.mxu0
        %v1113 = vadd.f32 0.0, %v1112
        %v1114 = vpop.f32.mrf.mxu0
        %v1115 = vadd.f32 0.0, %v1114
        %1116 = vmatmul.bf16.gmra.mxu0 %v479
        %v1117 = vpop.f32.mrf.mxu0
        %v1118 = vadd.f32 0.0, %v1117
        %v1119 = vpop.f32.mrf.mxu0
        %v1120 = vadd.f32 0.0, %v1119
        %1121 = vmatmul.bf16.gmra.mxu0 %v482
        %v1122 = vpop.f32.mrf.mxu0
        %v1123 = vadd.f32 0.0, %v1122
        %v1124 = vpop.f32.mrf.mxu0
        %v1125 = vadd.f32 0.0, %v1124
        %1126 = vmatmul.bf16.gmra.mxu0 %v485
        %v1127 = vpop.f32.mrf.mxu0
        %v1128 = vadd.f32 0.0, %v1127
        %v1129 = vpop.f32.mrf.mxu0
        %v1130 = vadd.f32 0.0, %v1129
        %1131 = vdwg.mxu0
        %1132 = vmatpush.bf16.msra.mxu0 %v711
        %1133 = vmatpush.bf16.msra.mxu0 %v709
        %1134 = vmatpush.bf16.msra.mxu0 %v707
        %1135 = vmatpush.bf16.msra.mxu0 %v705
        %1136 = vmatpush.bf16.msra.mxu0 %v703
        %1137 = vmatpush.bf16.msra.mxu0 %v701
        %1138 = vmatpush.bf16.msra.mxu0 %v699
        %1139 = vmatpush.bf16.msra.mxu0 %v697
        %1140 = vmatmul.bf16.gmra.mxu0 %v441
        %v1141 = vpop.f32.mrf.mxu0
        %v1142 = vadd.f32 %v1053, %v1141
        %v1143 = vpop.f32.mrf.mxu0
        %v1144 = vadd.f32 %v1055, %v1143
        %1145 = vmatmul.bf16.gmra.mxu0 %v444
        %v1146 = vpop.f32.mrf.mxu0
        %v1147 = vadd.f32 %v1058, %v1146
        %v1148 = vpop.f32.mrf.mxu0
        %v1149 = vadd.f32 %v1060, %v1148
        %1150 = vmatmul.bf16.gmra.mxu0 %v447
        %v1151 = vpop.f32.mrf.mxu0
        %v1152 = vadd.f32 %v1063, %v1151
        %v1153 = vpop.f32.mrf.mxu0
        %v1154 = vadd.f32 %v1065, %v1153
        %1155 = vmatmul.bf16.gmra.mxu0 %v450
        %v1156 = vpop.f32.mrf.mxu0
        %v1157 = vadd.f32 %v1068, %v1156
        %v1158 = vpop.f32.mrf.mxu0
        %v1159 = vadd.f32 %v1070, %v1158
        %1160 = vmatmul.bf16.gmra.mxu0 %v453
        %v1161 = vpop.f32.mrf.mxu0
        %v1162 = vadd.f32 %v1073, %v1161
        %v1163 = vpop.f32.mrf.mxu0
        %v1164 = vadd.f32 %v1075, %v1163
        %1165 = vmatmul.bf16.gmra.mxu0 %v456
        %v1166 = vpop.f32.mrf.mxu0
        %v1167 = vadd.f32 %v1078, %v1166
        %v1168 = vpop.f32.mrf.mxu0
        %v1169 = vadd.f32 %v1080, %v1168
        %1170 = vmatmul.bf16.gmra.mxu0 %v459
        %v1171 = vpop.f32.mrf.mxu0
        %v1172 = vadd.f32 %v1083, %v1171
        %v1173 = vpop.f32.mrf.mxu0
        %v1174 = vadd.f32 %v1085, %v1173
        %1175 = vmatmul.bf16.gmra.mxu0 %v462
        %v1176 = vpop.f32.mrf.mxu0
        %v1177 = vadd.f32 %v1088, %v1176
        %v1178 = vpop.f32.mrf.mxu0
        %v1179 = vadd.f32 %v1090, %v1178
        %1180 = vmatmul.bf16.gmra.mxu0 %v465
        %v1181 = vpop.f32.mrf.mxu0
        %v1182 = vadd.f32 %v1093, %v1181
        %v1183 = vpop.f32.mrf.mxu0
        %v1184 = vadd.f32 %v1095, %v1183
        %1185 = vmatmul.bf16.gmra.mxu0 %v468
        %v1186 = vpop.f32.mrf.mxu0
        %v1187 = vadd.f32 %v1098, %v1186
        %v1188 = vpop.f32.mrf.mxu0
        %v1189 = vadd.f32 %v1100, %v1188
        %1190 = vmatmul.bf16.gmra.mxu0 %v471
        %v1191 = vpop.f32.mrf.mxu0
        %v1192 = vadd.f32 %v1103, %v1191
        %v1193 = vpop.f32.mrf.mxu0
        %v1194 = vadd.f32 %v1105, %v1193
        %1195 = vmatmul.bf16.gmra.mxu0 %v474
        %v1196 = vpop.f32.mrf.mxu0
        %v1197 = vadd.f32 %v1108, %v1196
        %v1198 = vpop.f32.mrf.mxu0
        %v1199 = vadd.f32 %v1110, %v1198
        %1200 = vmatmul.bf16.gmra.mxu0 %v477
        %v1201 = vpop.f32.mrf.mxu0
        %v1202 = vadd.f32 %v1113, %v1201
        %v1203 = vpop.f32.mrf.mxu0
        %v1204 = vadd.f32 %v1115, %v1203
        %1205 = vmatmul.bf16.gmra.mxu0 %v480
        %v1206 = vpop.f32.mrf.mxu0
        %v1207 = vadd.f32 %v1118, %v1206
        %v1208 = vpop.f32.mrf.mxu0
        %v1209 = vadd.f32 %v1120, %v1208
        %1210 = vmatmul.bf16.gmra.mxu0 %v483
        %v1211 = vpop.f32.mrf.mxu0
        %v1212 = vadd.f32 %v1123, %v1211
        %v1213 = vpop.f32.mrf.mxu0
        %v1214 = vadd.f32 %v1125, %v1213
        %1215 = vmatmul.bf16.gmra.mxu0 %v486
        %v1216 = vpop.f32.mrf.mxu0
        %v1217 = vadd.f32 %v1128, %v1216
        %v1218 = vpop.f32.mrf.mxu0
        %v1219 = vadd.f32 %v1130, %v1218
        %1220 = vdwg.mxu0
        %1221 = vmatpush.bf16.msra.mxu0 %v727
        %1222 = vmatpush.bf16.msra.mxu0 %v725
        %1223 = vmatpush.bf16.msra.mxu0 %v723
        %1224 = vmatpush.bf16.msra.mxu0 %v721
        %1225 = vmatpush.bf16.msra.mxu0 %v719
        %1226 = vmatpush.bf16.msra.mxu0 %v717
        %1227 = vmatpush.bf16.msra.mxu0 %v715
        %1228 = vmatpush.bf16.msra.mxu0 %v713
        %1229 = vmatmul.bf16.gmra.mxu0 %v442
        %v1230 = vpop.f32.mrf.mxu0
        %v1231 = vadd.f32 %v1142, %v1230
        %v1232 = vpop.f32.mrf.mxu0
        %v1233 = vadd.f32 %v1144, %v1232
        %1234 = vmatmul.bf16.gmra.mxu0 %v445
        %v1235 = vpop.f32.mrf.mxu0
        %v1236 = vadd.f32 %v1147, %v1235
        %v1237 = vpop.f32.mrf.mxu0
        %v1238 = vadd.f32 %v1149, %v1237
        %1239 = vmatmul.bf16.gmra.mxu0 %v448
        %v1240 = vpop.f32.mrf.mxu0
        %v1241 = vadd.f32 %v1152, %v1240
        %v1242 = vpop.f32.mrf.mxu0
        %v1243 = vadd.f32 %v1154, %v1242
        %1244 = vmatmul.bf16.gmra.mxu0 %v451
        %v1245 = vpop.f32.mrf.mxu0
        %v1246 = vadd.f32 %v1157, %v1245
        %v1247 = vpop.f32.mrf.mxu0
        %v1248 = vadd.f32 %v1159, %v1247
        %1249 = vmatmul.bf16.gmra.mxu0 %v454
        %v1250 = vpop.f32.mrf.mxu0
        %v1251 = vadd.f32 %v1162, %v1250
        %v1252 = vpop.f32.mrf.mxu0
        %v1253 = vadd.f32 %v1164, %v1252
        %1254 = vmatmul.bf16.gmra.mxu0 %v457
        %v1255 = vpop.f32.mrf.mxu0
        %v1256 = vadd.f32 %v1167, %v1255
        %v1257 = vpop.f32.mrf.mxu0
        %v1258 = vadd.f32 %v1169, %v1257
        %1259 = vmatmul.bf16.gmra.mxu0 %v460
        %v1260 = vpop.f32.mrf.mxu0
        %v1261 = vadd.f32 %v1172, %v1260
        %v1262 = vpop.f32.mrf.mxu0
        %v1263 = vadd.f32 %v1174, %v1262
        %1264 = vmatmul.bf16.gmra.mxu0 %v463
        %v1265 = vpop.f32.mrf.mxu0
        %v1266 = vadd.f32 %v1177, %v1265
        %v1267 = vpop.f32.mrf.mxu0
        %v1268 = vadd.f32 %v1179, %v1267
        %1269 = vmatmul.bf16.gmra.mxu0 %v466
        %v1270 = vpop.f32.mrf.mxu0
        %v1271 = vadd.f32 %v1182, %v1270
        %v1272 = vpop.f32.mrf.mxu0
        %v1273 = vadd.f32 %v1184, %v1272
        %1274 = vmatmul.bf16.gmra.mxu0 %v469
        %v1275 = vpop.f32.mrf.mxu0
        %v1276 = vadd.f32 %v1187, %v1275
        %v1277 = vpop.f32.mrf.mxu0
        %v1278 = vadd.f32 %v1189, %v1277
        %1279 = vmatmul.bf16.gmra.mxu0 %v472
        %v1280 = vpop.f32.mrf.mxu0
        %v1281 = vadd.f32 %v1192, %v1280
        %v1282 = vpop.f32.mrf.mxu0
        %v1283 = vadd.f32 %v1194, %v1282
        %1284 = vmatmul.bf16.gmra.mxu0 %v475
        %v1285 = vpop.f32.mrf.mxu0
        %v1286 = vadd.f32 %v1197, %v1285
        %v1287 = vpop.f32.mrf.mxu0
        %v1288 = vadd.f32 %v1199, %v1287
        %1289 = vmatmul.bf16.gmra.mxu0 %v478
        %v1290 = vpop.f32.mrf.mxu0
        %v1291 = vadd.f32 %v1202, %v1290
        %v1292 = vpop.f32.mrf.mxu0
        %v1293 = vadd.f32 %v1204, %v1292
        %1294 = vmatmul.bf16.gmra.mxu0 %v481
        %v1295 = vpop.f32.mrf.mxu0
        %v1296 = vadd.f32 %v1207, %v1295
        %v1297 = vpop.f32.mrf.mxu0
        %v1298 = vadd.f32 %v1209, %v1297
        %1299 = vmatmul.bf16.gmra.mxu0 %v484
        %v1300 = vpop.f32.mrf.mxu0
        %v1301 = vadd.f32 %v1212, %v1300
        %v1302 = vpop.f32.mrf.mxu0
        %v1303 = vadd.f32 %v1214, %v1302
        %1304 = vmatmul.bf16.gmra.mxu0 %v487
        %v1305 = vpop.f32.mrf.mxu0
        %v1306 = vadd.f32 %v1217, %v1305
        %v1307 = vpop.f32.mrf.mxu0
        %v1308 = vadd.f32 %v1219, %v1307
        %1309 = vdwg.mxu0
        %v1310 = vpack.c.bf16 %v964, %v964
        %v1311 = vpack.c.bf16 %v966, %v966
        %v1312 = vpack.c.bf16 %v969, %v969
        %v1313 = vpack.c.bf16 %v971, %v971
        %v1314 = vpack.c.bf16 %v974, %v974
        %v1315 = vpack.c.bf16 %v976, %v976
        %v1316 = vpack.c.bf16 %v979, %v979
        %v1317 = vpack.c.bf16 %v981, %v981
        %v1318 = vpack.c.bf16 %v984, %v984
        %v1319 = vpack.c.bf16 %v986, %v986
        %v1320 = vpack.c.bf16 %v989, %v989
        %v1321 = vpack.c.bf16 %v991, %v991
        %v1322 = vpack.c.bf16 %v994, %v994
        %v1323 = vpack.c.bf16 %v996, %v996
        %v1324 = vpack.c.bf16 %v999, %v999
        %v1325 = vpack.c.bf16 %v1001, %v1001
        %v1326 = vpack.c.bf16 %v1004, %v1004
        %v1327 = vpack.c.bf16 %v1006, %v1006
        %v1328 = vpack.c.bf16 %v1009, %v1009
        %v1329 = vpack.c.bf16 %v1011, %v1011
        %v1330 = vpack.c.bf16 %v1014, %v1014
        %v1331 = vpack.c.bf16 %v1016, %v1016
        %v1332 = vpack.c.bf16 %v1019, %v1019
        %v1333 = vpack.c.bf16 %v1021, %v1021
        %v1334 = vpack.c.bf16 %v1024, %v1024
        %v1335 = vpack.c.bf16 %v1026, %v1026
        %v1336 = vpack.c.bf16 %v1029, %v1029
        %v1337 = vpack.c.bf16 %v1031, %v1031
        %v1338 = vpack.c.bf16 %v1034, %v1034
        %v1339 = vpack.c.bf16 %v1036, %v1036
        %v1340 = vpack.c.bf16 %v1039, %v1039
        %v1341 = vpack.c.bf16 %v1041, %v1041
        %v1342 = vpack.c.bf16 %v1231, %v1231
        %v1343 = vpack.c.bf16 %v1233, %v1233
        %v1344 = vpack.c.bf16 %v1236, %v1236
        %v1345 = vpack.c.bf16 %v1238, %v1238
        %v1346 = vpack.c.bf16 %v1241, %v1241
        %v1347 = vpack.c.bf16 %v1243, %v1243
        %v1348 = vpack.c.bf16 %v1246, %v1246
        %v1349 = vpack.c.bf16 %v1248, %v1248
        %v1350 = vpack.c.bf16 %v1251, %v1251
        %v1351 = vpack.c.bf16 %v1253, %v1253
        %v1352 = vpack.c.bf16 %v1256, %v1256
        %v1353 = vpack.c.bf16 %v1258, %v1258
        %v1354 = vpack.c.bf16 %v1261, %v1261
        %v1355 = vpack.c.bf16 %v1263, %v1263
        %v1356 = vpack.c.bf16 %v1266, %v1266
        %v1357 = vpack.c.bf16 %v1268, %v1268
        %v1358 = vpack.c.bf16 %v1271, %v1271
        %v1359 = vpack.c.bf16 %v1273, %v1273
        %v1360 = vpack.c.bf16 %v1276, %v1276
        %v1361 = vpack.c.bf16 %v1278, %v1278
        %v1362 = vpack.c.bf16 %v1281, %v1281
        %v1363 = vpack.c.bf16 %v1283, %v1283
        %v1364 = vpack.c.bf16 %v1286, %v1286
        %v1365 = vpack.c.bf16 %v1288, %v1288
        %v1366 = vpack.c.bf16 %v1291, %v1291
        %v1367 = vpack.c.bf16 %v1293, %v1293
        %v1368 = vpack.c.bf16 %v1296, %v1296
        %v1369 = vpack.c.bf16 %v1298, %v1298
        %v1370 = vpack.c.bf16 %v1301, %v1301
        %v1371 = vpack.c.bf16 %v1303, %v1303
        %v1372 = vpack.c.bf16 %v1306, %v1306
        %v1373 = vpack.c.bf16 %v1308, %v1308
        %v1382 = vunpack.c.l.b16 %v1310
        %v1383 = vunpack.c.l.b16 %v1311
        %v1384 = vunpack.c.l.b16 %v1312
        %v1385 = vunpack.c.l.b16 %v1313
        %v1386 = vunpack.c.l.b16 %v1314
        %v1387 = vunpack.c.l.b16 %v1315
        %v1388 = vunpack.c.l.b16 %v1316
        %v1389 = vunpack.c.l.b16 %v1317
        %v1390 = vpack.c.b16 %v1383, %v1382
        %v1391 = vpack.c.b16 %v1385, %v1384
        %v1392 = vpack.c.b16 %v1387, %v1386
        %v1393 = vpack.c.b16 %v1389, %v1388
        %1394 = vrot.lane.b32.xlu0 %v1390, 64
        %v1395 = vpop.permute.xlu0 %1394
        %1396 = vrot.lane.b32.xlu0 %v1391, 64
        %v1397 = vpop.permute.xlu0 %1396
        %1398 = vrot.lane.b32.xlu0 %v1392, 64
        %v1399 = vpop.permute.xlu0 %1398
        %1400 = vrot.lane.b32.xlu0 %v1393, 64
        %v1401 = vpop.permute.xlu0 %1400
        %vm1402 = vcmask 523264
        %v1404 = vsel %vm1402, %v1390, 0
        %v1407 = vsel %vm1402, %v1391, 0
        %v1410 = vsel %vm1402, %v1392, 0
        %v1413 = vsel %vm1402, %v1393, 0
        %v1416 = vsel %vm1402, %v1395, 0
        %v1419 = vsel %vm1402, %v1397, 0
        %v1422 = vsel %vm1402, %v1399, 0
        %v1425 = vsel %vm1402, %v1401, 0
        %1427 = vmatpush.bf16.xpose.msra.mxu0 0
        %1428 = vmatpush.bf16.xpose.msra.mxu0 0
        %1429 = vmatpush.bf16.xpose.msra.mxu0 0
        %1430 = vmatpush.bf16.xpose.msra.mxu0 0
        %1431 = vmatpush.bf16.xpose.msra.mxu0 %v1425
        %1432 = vmatpush.bf16.xpose.msra.mxu0 %v1422
        %1433 = vmatpush.bf16.xpose.msra.mxu0 %v1419
        %1434 = vmatpush.bf16.xpose.msra.mxu0 %v1416
        %1435 = vmatmul.bf16.gmra.mxu0 %v1404
        %v1436 = vpop.f32.mrf.mxu0
        %v1437 = vadd.f32 0.0, %v1436
        %v1438 = vpop.f32.mrf.mxu0
        %v1439 = vadd.f32 0.0, %v1438
        %1440 = vmatmul.bf16.gmra.mxu0 %v1407
        %v1441 = vpop.f32.mrf.mxu0
        %v1442 = vadd.f32 0.0, %v1441
        %v1443 = vpop.f32.mrf.mxu0
        %v1444 = vadd.f32 0.0, %v1443
        %1445 = vmatmul.bf16.gmra.mxu0 %v1410
        %v1446 = vpop.f32.mrf.mxu0
        %v1447 = vadd.f32 0.0, %v1446
        %v1448 = vpop.f32.mrf.mxu0
        %v1449 = vadd.f32 0.0, %v1448
        %1450 = vmatmul.bf16.gmra.mxu0 %v1413
        %v1451 = vpop.f32.mrf.mxu0
        %v1452 = vadd.f32 0.0, %v1451
        %v1453 = vpop.f32.mrf.mxu0
        %v1454 = vadd.f32 0.0, %v1453
        %1455 = vdwg.mxu0
        %v1464 = vunpack.c.l.b16 %v1318
        %v1465 = vunpack.c.l.b16 %v1319
        %v1466 = vunpack.c.l.b16 %v1320
        %v1467 = vunpack.c.l.b16 %v1321
        %v1468 = vunpack.c.l.b16 %v1322
        %v1469 = vunpack.c.l.b16 %v1323
        %v1470 = vunpack.c.l.b16 %v1324
        %v1471 = vunpack.c.l.b16 %v1325
        %v1472 = vpack.c.b16 %v1465, %v1464
        %v1473 = vpack.c.b16 %v1467, %v1466
        %v1474 = vpack.c.b16 %v1469, %v1468
        %v1475 = vpack.c.b16 %v1471, %v1470
        %1476 = vrot.lane.b32.xlu0 %v1472, 64
        %v1477 = vpop.permute.xlu0 %1476
        %1478 = vrot.lane.b32.xlu0 %v1473, 64
        %v1479 = vpop.permute.xlu0 %1478
        %1480 = vrot.lane.b32.xlu0 %v1474, 64
        %v1481 = vpop.permute.xlu0 %1480
        %1482 = vrot.lane.b32.xlu0 %v1475, 64
        %v1483 = vpop.permute.xlu0 %1482
        %v1485 = vsel %vm1402, %v1472, 0
        %v1488 = vsel %vm1402, %v1473, 0
        %v1491 = vsel %vm1402, %v1474, 0
        %v1494 = vsel %vm1402, %v1475, 0
        %v1497 = vsel %vm1402, %v1477, 0
        %v1500 = vsel %vm1402, %v1479, 0
        %v1503 = vsel %vm1402, %v1481, 0
        %v1506 = vsel %vm1402, %v1483, 0
        %1508 = vmatpush.bf16.xpose.msra.mxu0 0
        %1509 = vmatpush.bf16.xpose.msra.mxu0 0
        %1510 = vmatpush.bf16.xpose.msra.mxu0 0
        %1511 = vmatpush.bf16.xpose.msra.mxu0 0
        %1512 = vmatpush.bf16.xpose.msra.mxu0 %v1506
        %1513 = vmatpush.bf16.xpose.msra.mxu0 %v1503
        %1514 = vmatpush.bf16.xpose.msra.mxu0 %v1500
        %1515 = vmatpush.bf16.xpose.msra.mxu0 %v1497
        %1516 = vmatmul.bf16.gmra.mxu0 %v1485
        %v1517 = vpop.f32.mrf.mxu0
        %v1518 = vadd.f32 0.0, %v1517
        %v1519 = vpop.f32.mrf.mxu0
        %v1520 = vadd.f32 0.0, %v1519
        %1521 = vmatmul.bf16.gmra.mxu0 %v1488
        %v1522 = vpop.f32.mrf.mxu0
        %v1523 = vadd.f32 0.0, %v1522
        %v1524 = vpop.f32.mrf.mxu0
        %v1525 = vadd.f32 0.0, %v1524
        %1526 = vmatmul.bf16.gmra.mxu0 %v1491
        %v1527 = vpop.f32.mrf.mxu0
        %v1528 = vadd.f32 0.0, %v1527
        %v1529 = vpop.f32.mrf.mxu0
        %v1530 = vadd.f32 0.0, %v1529
        %1531 = vmatmul.bf16.gmra.mxu0 %v1494
        %v1532 = vpop.f32.mrf.mxu0
        %v1533 = vadd.f32 0.0, %v1532
        %v1534 = vpop.f32.mrf.mxu0
        %v1535 = vadd.f32 0.0, %v1534
        %1536 = vdwg.mxu0
        %v1545 = vunpack.c.l.b16 %v1326
        %v1546 = vunpack.c.l.b16 %v1327
        %v1547 = vunpack.c.l.b16 %v1328
        %v1548 = vunpack.c.l.b16 %v1329
        %v1549 = vunpack.c.l.b16 %v1330
        %v1550 = vunpack.c.l.b16 %v1331
        %v1551 = vunpack.c.l.b16 %v1332
        %v1552 = vunpack.c.l.b16 %v1333
        %v1553 = vpack.c.b16 %v1546, %v1545
        %v1554 = vpack.c.b16 %v1548, %v1547
        %v1555 = vpack.c.b16 %v1550, %v1549
        %v1556 = vpack.c.b16 %v1552, %v1551
        %1557 = vrot.lane.b32.xlu0 %v1553, 64
        %v1558 = vpop.permute.xlu0 %1557
        %1559 = vrot.lane.b32.xlu0 %v1554, 64
        %v1560 = vpop.permute.xlu0 %1559
        %1561 = vrot.lane.b32.xlu0 %v1555, 64
        %v1562 = vpop.permute.xlu0 %1561
        %1563 = vrot.lane.b32.xlu0 %v1556, 64
        %v1564 = vpop.permute.xlu0 %1563
        %v1566 = vsel %vm1402, %v1553, 0
        %v1569 = vsel %vm1402, %v1554, 0
        %v1572 = vsel %vm1402, %v1555, 0
        %v1575 = vsel %vm1402, %v1556, 0
        %v1578 = vsel %vm1402, %v1558, 0
        %v1581 = vsel %vm1402, %v1560, 0
        %v1584 = vsel %vm1402, %v1562, 0
        %v1587 = vsel %vm1402, %v1564, 0
        %1589 = vmatpush.bf16.xpose.msra.mxu0 0
        %1590 = vmatpush.bf16.xpose.msra.mxu0 0
        %1591 = vmatpush.bf16.xpose.msra.mxu0 0
        %1592 = vmatpush.bf16.xpose.msra.mxu0 0
        %1593 = vmatpush.bf16.xpose.msra.mxu0 %v1587
        %1594 = vmatpush.bf16.xpose.msra.mxu0 %v1584
        %1595 = vmatpush.bf16.xpose.msra.mxu0 %v1581
        %1596 = vmatpush.bf16.xpose.msra.mxu0 %v1578
        %1597 = vmatmul.bf16.gmra.mxu0 %v1566
        %v1598 = vpop.f32.mrf.mxu0
        %v1599 = vadd.f32 0.0, %v1598
        %v1600 = vpop.f32.mrf.mxu0
        %v1601 = vadd.f32 0.0, %v1600
        %1602 = vmatmul.bf16.gmra.mxu0 %v1569
        %v1603 = vpop.f32.mrf.mxu0
        %v1604 = vadd.f32 0.0, %v1603
        %v1605 = vpop.f32.mrf.mxu0
        %v1606 = vadd.f32 0.0, %v1605
        %1607 = vmatmul.bf16.gmra.mxu0 %v1572
        %v1608 = vpop.f32.mrf.mxu0
        %v1609 = vadd.f32 0.0, %v1608
        %v1610 = vpop.f32.mrf.mxu0
        %v1611 = vadd.f32 0.0, %v1610
        %1612 = vmatmul.bf16.gmra.mxu0 %v1575
        %v1613 = vpop.f32.mrf.mxu0
        %v1614 = vadd.f32 0.0, %v1613
        %v1615 = vpop.f32.mrf.mxu0
        %v1616 = vadd.f32 0.0, %v1615
        %1617 = vdwg.mxu0
        %v1626 = vunpack.c.l.b16 %v1334
        %v1627 = vunpack.c.l.b16 %v1335
        %v1628 = vunpack.c.l.b16 %v1336
        %v1629 = vunpack.c.l.b16 %v1337
        %v1630 = vunpack.c.l.b16 %v1338
        %v1631 = vunpack.c.l.b16 %v1339
        %v1632 = vunpack.c.l.b16 %v1340
        %v1633 = vunpack.c.l.b16 %v1341
        %v1634 = vpack.c.b16 %v1627, %v1626
        %v1635 = vpack.c.b16 %v1629, %v1628
        %v1636 = vpack.c.b16 %v1631, %v1630
        %v1637 = vpack.c.b16 %v1633, %v1632
        %1638 = vrot.lane.b32.xlu0 %v1634, 64
        %v1639 = vpop.permute.xlu0 %1638
        %1640 = vrot.lane.b32.xlu0 %v1635, 64
        %v1641 = vpop.permute.xlu0 %1640
        %1642 = vrot.lane.b32.xlu0 %v1636, 64
        %v1643 = vpop.permute.xlu0 %1642
        %1644 = vrot.lane.b32.xlu0 %v1637, 64
        %v1645 = vpop.permute.xlu0 %1644
        %v1647 = vsel %vm1402, %v1634, 0
        %v1650 = vsel %vm1402, %v1635, 0
        %v1653 = vsel %vm1402, %v1636, 0
        %v1656 = vsel %vm1402, %v1637, 0
        %v1659 = vsel %vm1402, %v1639, 0
        %v1662 = vsel %vm1402, %v1641, 0
        %v1665 = vsel %vm1402, %v1643, 0
        %v1668 = vsel %vm1402, %v1645, 0
        %1670 = vmatpush.bf16.xpose.msra.mxu0 0
        %1671 = vmatpush.bf16.xpose.msra.mxu0 0
        %1672 = vmatpush.bf16.xpose.msra.mxu0 0
        %1673 = vmatpush.bf16.xpose.msra.mxu0 0
        %1674 = vmatpush.bf16.xpose.msra.mxu0 %v1668
        %1675 = vmatpush.bf16.xpose.msra.mxu0 %v1665
        %1676 = vmatpush.bf16.xpose.msra.mxu0 %v1662
        %1677 = vmatpush.bf16.xpose.msra.mxu0 %v1659
        %1678 = vmatmul.bf16.gmra.mxu0 %v1647
        %v1679 = vpop.f32.mrf.mxu0
        %v1680 = vadd.f32 0.0, %v1679
        %v1681 = vpop.f32.mrf.mxu0
        %v1682 = vadd.f32 0.0, %v1681
        %1683 = vmatmul.bf16.gmra.mxu0 %v1650
        %v1684 = vpop.f32.mrf.mxu0
        %v1685 = vadd.f32 0.0, %v1684
        %v1686 = vpop.f32.mrf.mxu0
        %v1687 = vadd.f32 0.0, %v1686
        %1688 = vmatmul.bf16.gmra.mxu0 %v1653
        %v1689 = vpop.f32.mrf.mxu0
        %v1690 = vadd.f32 0.0, %v1689
        %v1691 = vpop.f32.mrf.mxu0
        %v1692 = vadd.f32 0.0, %v1691
        %1693 = vmatmul.bf16.gmra.mxu0 %v1656
        %v1694 = vpop.f32.mrf.mxu0
        %v1695 = vadd.f32 0.0, %v1694
        %v1696 = vpop.f32.mrf.mxu0
        %v1697 = vadd.f32 0.0, %v1696
        %1698 = vdwg.mxu0
        %v1699 = vlaneseq
        %v1700 = vshrl.u32 %v1699, 7
        %v1701 = vadd.s32 %v1700, 8
        %v1702 = vadd.s32 %v1700, 16
        %v1703 = vadd.s32 %v1700, 24
        %v1704 = vadd.s32 %v1700, 32
        %v1705 = vadd.s32 %v1700, 40
        %v1706 = vadd.s32 %v1700, 48
        %v1707 = vadd.s32 %v1700, 56
        %v1708 = vlaneseq
        %v1709 = vand.u32 %v1708, 127
        %vm1710 = vcmp.le.s32.totalorder %v1709, %v1700
        %vm1711 = vcmp.le.s32.totalorder %v1709, %v1701
        %vm1712 = vcmp.le.s32.totalorder %v1709, %v1702
        %vm1713 = vcmp.le.s32.totalorder %v1709, %v1703
        %vm1714 = vcmp.le.s32.totalorder %v1709, %v1704
        %vm1715 = vcmp.le.s32.totalorder %v1709, %v1705
        %vm1716 = vcmp.le.s32.totalorder %v1709, %v1706
        %vm1717 = vcmp.le.s32.totalorder %v1709, %v1707
        %v1718 = vsel %vm1710, 1, 0
        %v1719 = vsel %vm1711, 1, 0
        %v1720 = vsel %vm1712, 1, 0
        %v1721 = vsel %vm1713, 1, 0
        %v1722 = vsel %vm1714, 1, 0
        %v1723 = vsel %vm1715, 1, 0
        %v1724 = vsel %vm1716, 1, 0
        %v1725 = vsel %vm1717, 1, 0
        %vm1726 = vcmp.eq.s32.totalorder %v1718, 1
        %vm1727 = vcmp.eq.s32.totalorder %v1719, 1
        %vm1728 = vcmp.eq.s32.totalorder %v1720, 1
        %vm1729 = vcmp.eq.s32.totalorder %v1721, 1
        %vm1730 = vcmp.eq.s32.totalorder %v1722, 1
        %vm1731 = vcmp.eq.s32.totalorder %v1723, 1
        %vm1732 = vcmp.eq.s32.totalorder %v1724, 1
        %vm1733 = vcmp.eq.s32.totalorder %v1725, 1
        %v1734 = vsel %vm1726, %v1437, -1e+30
        %v1735 = vsel %vm1727, %v1439, -1e+30
        %v1736 = vsel %vm1728, %v1442, -1e+30
        %v1737 = vsel %vm1729, %v1444, -1e+30
        %v1738 = vsel %vm1730, %v1447, -1e+30
        %v1739 = vsel %vm1731, %v1449, -1e+30
        %v1740 = vsel %vm1732, %v1452, -1e+30
        %v1741 = vsel %vm1733, %v1454, -1e+30
        %v1742 = vsel %vm1726, %v1518, -1e+30
        %v1743 = vsel %vm1727, %v1520, -1e+30
        %v1744 = vsel %vm1728, %v1523, -1e+30
        %v1745 = vsel %vm1729, %v1525, -1e+30
        %v1746 = vsel %vm1730, %v1528, -1e+30
        %v1747 = vsel %vm1731, %v1530, -1e+30
        %v1748 = vsel %vm1732, %v1533, -1e+30
        %v1749 = vsel %vm1733, %v1535, -1e+30
        %v1750 = vsel %vm1726, %v1599, -1e+30
        %v1751 = vsel %vm1727, %v1601, -1e+30
        %v1752 = vsel %vm1728, %v1604, -1e+30
        %v1753 = vsel %vm1729, %v1606, -1e+30
        %v1754 = vsel %vm1730, %v1609, -1e+30
        %v1755 = vsel %vm1731, %v1611, -1e+30
        %v1756 = vsel %vm1732, %v1614, -1e+30
        %v1757 = vsel %vm1733, %v1616, -1e+30
        %v1758 = vsel %vm1726, %v1680, -1e+30
        %v1759 = vsel %vm1727, %v1682, -1e+30
        %v1760 = vsel %vm1728, %v1685, -1e+30
        %v1761 = vsel %vm1729, %v1687, -1e+30
        %v1762 = vsel %vm1730, %v1690, -1e+30
        %v1763 = vsel %vm1731, %v1692, -1e+30
        %v1764 = vsel %vm1732, %v1695, -1e+30
        %v1765 = vsel %vm1733, %v1697, -1e+30
        %v1766 = vsel %vm1402, %v1734, -inf
        %1767 = vmax.xlane.f32.xlu0 %v1766
        %v1768 = vpop.xlane.xlu0 %1767
        %v1769 = vsel %vm1402, %v1735, -inf
        %1770 = vmax.xlane.f32.xlu0 %v1769
        %v1771 = vpop.xlane.xlu0 %1770
        %v1772 = vsel %vm1402, %v1736, -inf
        %1773 = vmax.xlane.f32.xlu0 %v1772
        %v1774 = vpop.xlane.xlu0 %1773
        %v1775 = vsel %vm1402, %v1737, -inf
        %1776 = vmax.xlane.f32.xlu0 %v1775
        %v1777 = vpop.xlane.xlu0 %1776
        %v1778 = vsel %vm1402, %v1738, -inf
        %1779 = vmax.xlane.f32.xlu0 %v1778
        %v1780 = vpop.xlane.xlu0 %1779
        %v1781 = vsel %vm1402, %v1739, -inf
        %1782 = vmax.xlane.f32.xlu0 %v1781
        %v1783 = vpop.xlane.xlu0 %1782
        %v1784 = vsel %vm1402, %v1740, -inf
        %1785 = vmax.xlane.f32.xlu0 %v1784
        %v1786 = vpop.xlane.xlu0 %1785
        %v1787 = vsel %vm1402, %v1741, -inf
        %1788 = vmax.xlane.f32.xlu0 %v1787
        %v1789 = vpop.xlane.xlu0 %1788
        %v1790 = vsel %vm1402, %v1742, -inf
        %1791 = vmax.xlane.f32.xlu0 %v1790
        %v1792 = vpop.xlane.xlu0 %1791
        %v1793 = vsel %vm1402, %v1743, -inf
        %1794 = vmax.xlane.f32.xlu0 %v1793
        %v1795 = vpop.xlane.xlu0 %1794
        %v1796 = vsel %vm1402, %v1744, -inf
        %1797 = vmax.xlane.f32.xlu0 %v1796
        %v1798 = vpop.xlane.xlu0 %1797
        %v1799 = vsel %vm1402, %v1745, -inf
        %1800 = vmax.xlane.f32.xlu0 %v1799
        %v1801 = vpop.xlane.xlu0 %1800
        %v1802 = vsel %vm1402, %v1746, -inf
        %1803 = vmax.xlane.f32.xlu0 %v1802
        %v1804 = vpop.xlane.xlu0 %1803
        %v1805 = vsel %vm1402, %v1747, -inf
        %1806 = vmax.xlane.f32.xlu0 %v1805
        %v1807 = vpop.xlane.xlu0 %1806
        %v1808 = vsel %vm1402, %v1748, -inf
        %1809 = vmax.xlane.f32.xlu0 %v1808
        %v1810 = vpop.xlane.xlu0 %1809
        %v1811 = vsel %vm1402, %v1749, -inf
        %1812 = vmax.xlane.f32.xlu0 %v1811
        %v1813 = vpop.xlane.xlu0 %1812
        %v1814 = vsel %vm1402, %v1750, -inf
        %1815 = vmax.xlane.f32.xlu0 %v1814
        %v1816 = vpop.xlane.xlu0 %1815
        %v1817 = vsel %vm1402, %v1751, -inf
        %1818 = vmax.xlane.f32.xlu0 %v1817
        %v1819 = vpop.xlane.xlu0 %1818
        %v1820 = vsel %vm1402, %v1752, -inf
        %1821 = vmax.xlane.f32.xlu0 %v1820
        %v1822 = vpop.xlane.xlu0 %1821
        %v1823 = vsel %vm1402, %v1753, -inf
        %1824 = vmax.xlane.f32.xlu0 %v1823
        %v1825 = vpop.xlane.xlu0 %1824
        %v1826 = vsel %vm1402, %v1754, -inf
        %1827 = vmax.xlane.f32.xlu0 %v1826
        %v1828 = vpop.xlane.xlu0 %1827
        %v1829 = vsel %vm1402, %v1755, -inf
        %1830 = vmax.xlane.f32.xlu0 %v1829
        %v1831 = vpop.xlane.xlu0 %1830
        %v1832 = vsel %vm1402, %v1756, -inf
        %1833 = vmax.xlane.f32.xlu0 %v1832
        %v1834 = vpop.xlane.xlu0 %1833
        %v1835 = vsel %vm1402, %v1757, -inf
        %1836 = vmax.xlane.f32.xlu0 %v1835
        %v1837 = vpop.xlane.xlu0 %1836
        %v1838 = vsel %vm1402, %v1758, -inf
        %1839 = vmax.xlane.f32.xlu0 %v1838
        %v1840 = vpop.xlane.xlu0 %1839
        %v1841 = vsel %vm1402, %v1759, -inf
        %1842 = vmax.xlane.f32.xlu0 %v1841
        %v1843 = vpop.xlane.xlu0 %1842
        %v1844 = vsel %vm1402, %v1760, -inf
        %1845 = vmax.xlane.f32.xlu0 %v1844
        %v1846 = vpop.xlane.xlu0 %1845
        %v1847 = vsel %vm1402, %v1761, -inf
        %1848 = vmax.xlane.f32.xlu0 %v1847
        %v1849 = vpop.xlane.xlu0 %1848
        %v1850 = vsel %vm1402, %v1762, -inf
        %1851 = vmax.xlane.f32.xlu0 %v1850
        %v1852 = vpop.xlane.xlu0 %1851
        %v1853 = vsel %vm1402, %v1763, -inf
        %1854 = vmax.xlane.f32.xlu0 %v1853
        %v1855 = vpop.xlane.xlu0 %1854
        %v1856 = vsel %vm1402, %v1764, -inf
        %1857 = vmax.xlane.f32.xlu0 %v1856
        %v1858 = vpop.xlane.xlu0 %1857
        %v1859 = vsel %vm1402, %v1765, -inf
        %1860 = vmax.xlane.f32.xlu0 %v1859
        %v1861 = vpop.xlane.xlu0 %1860
        %v1862 = vsub.f32 %v1734, %v1768
        %v1863 = vsub.f32 %v1735, %v1771
        %v1864 = vsub.f32 %v1736, %v1774
        %v1865 = vsub.f32 %v1737, %v1777
        %v1866 = vsub.f32 %v1738, %v1780
        %v1867 = vsub.f32 %v1739, %v1783
        %v1868 = vsub.f32 %v1740, %v1786
        %v1869 = vsub.f32 %v1741, %v1789
        %v1870 = vsub.f32 %v1742, %v1792
        %v1871 = vsub.f32 %v1743, %v1795
        %v1872 = vsub.f32 %v1744, %v1798
        %v1873 = vsub.f32 %v1745, %v1801
        %v1874 = vsub.f32 %v1746, %v1804
        %v1875 = vsub.f32 %v1747, %v1807
        %v1876 = vsub.f32 %v1748, %v1810
        %v1877 = vsub.f32 %v1749, %v1813
        %v1878 = vsub.f32 %v1750, %v1816
        %v1879 = vsub.f32 %v1751, %v1819
        %v1880 = vsub.f32 %v1752, %v1822
        %v1881 = vsub.f32 %v1753, %v1825
        %v1882 = vsub.f32 %v1754, %v1828
        %v1883 = vsub.f32 %v1755, %v1831
        %v1884 = vsub.f32 %v1756, %v1834
        %v1885 = vsub.f32 %v1757, %v1837
        %v1886 = vsub.f32 %v1758, %v1840
        %v1887 = vsub.f32 %v1759, %v1843
        %v1888 = vsub.f32 %v1760, %v1846
        %v1889 = vsub.f32 %v1761, %v1849
        %v1890 = vsub.f32 %v1762, %v1852
        %v1891 = vsub.f32 %v1763, %v1855
        %v1892 = vsub.f32 %v1764, %v1858
        %v1893 = vsub.f32 %v1765, %v1861
        %v1894 = vmul.f32 %v1862, 1.442695
        %v1895 = vpow.pop %v1894
        %v1896 = vmul.f32 %v1863, 1.442695
        %v1897 = vpow.pop %v1896
        %v1898 = vmul.f32 %v1864, 1.442695
        %v1899 = vpow.pop %v1898
        %v1900 = vmul.f32 %v1865, 1.442695
        %v1901 = vpow.pop %v1900
        %v1902 = vmul.f32 %v1866, 1.442695
        %v1903 = vpow.pop %v1902
        %v1904 = vmul.f32 %v1867, 1.442695
        %v1905 = vpow.pop %v1904
        %v1906 = vmul.f32 %v1868, 1.442695
        %v1907 = vpow.pop %v1906
        %v1908 = vmul.f32 %v1869, 1.442695
        %v1909 = vpow.pop %v1908
        %v1910 = vmul.f32 %v1870, 1.442695
        %v1911 = vpow.pop %v1910
        %v1912 = vmul.f32 %v1871, 1.442695
        %v1913 = vpow.pop %v1912
        %v1914 = vmul.f32 %v1872, 1.442695
        %v1915 = vpow.pop %v1914
        %v1916 = vmul.f32 %v1873, 1.442695
        %v1917 = vpow.pop %v1916
        %v1918 = vmul.f32 %v1874, 1.442695
        %v1919 = vpow.pop %v1918
        %v1920 = vmul.f32 %v1875, 1.442695
        %v1921 = vpow.pop %v1920
        %v1922 = vmul.f32 %v1876, 1.442695
        %v1923 = vpow.pop %v1922
        %v1924 = vmul.f32 %v1877, 1.442695
        %v1925 = vpow.pop %v1924
        %v1926 = vmul.f32 %v1878, 1.442695
        %v1927 = vpow.pop %v1926
        %v1928 = vmul.f32 %v1879, 1.442695
        %v1929 = vpow.pop %v1928
        %v1930 = vmul.f32 %v1880, 1.442695
        %v1931 = vpow.pop %v1930
        %v1932 = vmul.f32 %v1881, 1.442695
        %v1933 = vpow.pop %v1932
        %v1934 = vmul.f32 %v1882, 1.442695
        %v1935 = vpow.pop %v1934
        %v1936 = vmul.f32 %v1883, 1.442695
        %v1937 = vpow.pop %v1936
        %v1938 = vmul.f32 %v1884, 1.442695
        %v1939 = vpow.pop %v1938
        %v1940 = vmul.f32 %v1885, 1.442695
        %v1941 = vpow.pop %v1940
        %v1942 = vmul.f32 %v1886, 1.442695
        %v1943 = vpow.pop %v1942
        %v1944 = vmul.f32 %v1887, 1.442695
        %v1945 = vpow.pop %v1944
        %v1946 = vmul.f32 %v1888, 1.442695
        %v1947 = vpow.pop %v1946
        %v1948 = vmul.f32 %v1889, 1.442695
        %v1949 = vpow.pop %v1948
        %v1950 = vmul.f32 %v1890, 1.442695
        %v1951 = vpow.pop %v1950
        %v1952 = vmul.f32 %v1891, 1.442695
        %v1953 = vpow.pop %v1952
        %v1954 = vmul.f32 %v1892, 1.442695
        %v1955 = vpow.pop %v1954
        %v1956 = vmul.f32 %v1893, 1.442695
        %v1957 = vpow.pop %v1956
        %v1958 = vsel %vm1402, %v1895, 0.0
        %1959 = vadd.xlane.f32.xlu0 %v1958
        %v1960 = vpop.xlane.xlu0 %1959
        %v1961 = vsel %vm1402, %v1897, 0.0
        %1962 = vadd.xlane.f32.xlu0 %v1961
        %v1963 = vpop.xlane.xlu0 %1962
        %v1964 = vsel %vm1402, %v1899, 0.0
        %1965 = vadd.xlane.f32.xlu0 %v1964
        %v1966 = vpop.xlane.xlu0 %1965
        %v1967 = vsel %vm1402, %v1901, 0.0
        %1968 = vadd.xlane.f32.xlu0 %v1967
        %v1969 = vpop.xlane.xlu0 %1968
        %v1970 = vsel %vm1402, %v1903, 0.0
        %1971 = vadd.xlane.f32.xlu0 %v1970
        %v1972 = vpop.xlane.xlu0 %1971
        %v1973 = vsel %vm1402, %v1905, 0.0
        %1974 = vadd.xlane.f32.xlu0 %v1973
        %v1975 = vpop.xlane.xlu0 %1974
        %v1976 = vsel %vm1402, %v1907, 0.0
        %1977 = vadd.xlane.f32.xlu0 %v1976
        %v1978 = vpop.xlane.xlu0 %1977
        %v1979 = vsel %vm1402, %v1909, 0.0
        %1980 = vadd.xlane.f32.xlu0 %v1979
        %v1981 = vpop.xlane.xlu0 %1980
        %v1982 = vsel %vm1402, %v1911, 0.0
        %1983 = vadd.xlane.f32.xlu0 %v1982
        %v1984 = vpop.xlane.xlu0 %1983
        %v1985 = vsel %vm1402, %v1913, 0.0
        %1986 = vadd.xlane.f32.xlu0 %v1985
        %v1987 = vpop.xlane.xlu0 %1986
        %v1988 = vsel %vm1402, %v1915, 0.0
        %1989 = vadd.xlane.f32.xlu0 %v1988
        %v1990 = vpop.xlane.xlu0 %1989
        %v1991 = vsel %vm1402, %v1917, 0.0
        %1992 = vadd.xlane.f32.xlu0 %v1991
        %v1993 = vpop.xlane.xlu0 %1992
        %v1994 = vsel %vm1402, %v1919, 0.0
        %1995 = vadd.xlane.f32.xlu0 %v1994
        %v1996 = vpop.xlane.xlu0 %1995
        %v1997 = vsel %vm1402, %v1921, 0.0
        %1998 = vadd.xlane.f32.xlu0 %v1997
        %v1999 = vpop.xlane.xlu0 %1998
        %v2000 = vsel %vm1402, %v1923, 0.0
        %2001 = vadd.xlane.f32.xlu0 %v2000
        %v2002 = vpop.xlane.xlu0 %2001
        %v2003 = vsel %vm1402, %v1925, 0.0
        %2004 = vadd.xlane.f32.xlu0 %v2003
        %v2005 = vpop.xlane.xlu0 %2004
        %v2006 = vsel %vm1402, %v1927, 0.0
        %2007 = vadd.xlane.f32.xlu0 %v2006
        %v2008 = vpop.xlane.xlu0 %2007
        %v2009 = vsel %vm1402, %v1929, 0.0
        %2010 = vadd.xlane.f32.xlu0 %v2009
        %v2011 = vpop.xlane.xlu0 %2010
        %v2012 = vsel %vm1402, %v1931, 0.0
        %2013 = vadd.xlane.f32.xlu0 %v2012
        %v2014 = vpop.xlane.xlu0 %2013
        %v2015 = vsel %vm1402, %v1933, 0.0
        %2016 = vadd.xlane.f32.xlu0 %v2015
        %v2017 = vpop.xlane.xlu0 %2016
        %v2018 = vsel %vm1402, %v1935, 0.0
        %2019 = vadd.xlane.f32.xlu0 %v2018
        %v2020 = vpop.xlane.xlu0 %2019
        %v2021 = vsel %vm1402, %v1937, 0.0
        %2022 = vadd.xlane.f32.xlu0 %v2021
        %v2023 = vpop.xlane.xlu0 %2022
        %v2024 = vsel %vm1402, %v1939, 0.0
        %2025 = vadd.xlane.f32.xlu0 %v2024
        %v2026 = vpop.xlane.xlu0 %2025
        %v2027 = vsel %vm1402, %v1941, 0.0
        %2028 = vadd.xlane.f32.xlu0 %v2027
        %v2029 = vpop.xlane.xlu0 %2028
        %v2030 = vsel %vm1402, %v1943, 0.0
        %2031 = vadd.xlane.f32.xlu0 %v2030
        %v2032 = vpop.xlane.xlu0 %2031
        %v2033 = vsel %vm1402, %v1945, 0.0
        %2034 = vadd.xlane.f32.xlu0 %v2033
        %v2035 = vpop.xlane.xlu0 %2034
        %v2036 = vsel %vm1402, %v1947, 0.0
        %2037 = vadd.xlane.f32.xlu0 %v2036
        %v2038 = vpop.xlane.xlu0 %2037
        %v2039 = vsel %vm1402, %v1949, 0.0
        %2040 = vadd.xlane.f32.xlu0 %v2039
        %v2041 = vpop.xlane.xlu0 %2040
        %v2042 = vsel %vm1402, %v1951, 0.0
        %2043 = vadd.xlane.f32.xlu0 %v2042
        %v2044 = vpop.xlane.xlu0 %2043
        %v2045 = vsel %vm1402, %v1953, 0.0
        %2046 = vadd.xlane.f32.xlu0 %v2045
        %v2047 = vpop.xlane.xlu0 %2046
        %v2048 = vsel %vm1402, %v1955, 0.0
        %2049 = vadd.xlane.f32.xlu0 %v2048
        %v2050 = vpop.xlane.xlu0 %2049
        %v2051 = vsel %vm1402, %v1957, 0.0
        %2052 = vadd.xlane.f32.xlu0 %v2051
        %v2053 = vpop.xlane.xlu0 %2052
        %v2054 = vrcp.pop %v1960
        %v2055 = vrcp.pop %v1963
        %v2056 = vrcp.pop %v1966
        %v2057 = vrcp.pop %v1969
        %v2058 = vrcp.pop %v1972
        %v2059 = vrcp.pop %v1975
        %v2060 = vrcp.pop %v1978
        %v2061 = vrcp.pop %v1981
        %v2062 = vrcp.pop %v1984
        %v2063 = vrcp.pop %v1987
        %v2064 = vrcp.pop %v1990
        %v2065 = vrcp.pop %v1993
        %v2066 = vrcp.pop %v1996
        %v2067 = vrcp.pop %v1999
        %v2068 = vrcp.pop %v2002
        %v2069 = vrcp.pop %v2005
        %v2070 = vrcp.pop %v2008
        %v2071 = vrcp.pop %v2011
        %v2072 = vrcp.pop %v2014
        %v2073 = vrcp.pop %v2017
        %v2074 = vrcp.pop %v2020
        %v2075 = vrcp.pop %v2023
        %v2076 = vrcp.pop %v2026
        %v2077 = vrcp.pop %v2029
        %v2078 = vrcp.pop %v2032
        %v2079 = vrcp.pop %v2035
        %v2080 = vrcp.pop %v2038
        %v2081 = vrcp.pop %v2041
        %v2082 = vrcp.pop %v2044
        %v2083 = vrcp.pop %v2047
        %v2084 = vrcp.pop %v2050
        %v2085 = vrcp.pop %v2053
        %v2086 = vmul.f32 %v1895, %v2054
        %v2087 = vmul.f32 %v1897, %v2055
        %v2088 = vmul.f32 %v1899, %v2056
        %v2089 = vmul.f32 %v1901, %v2057
        %v2090 = vmul.f32 %v1903, %v2058
        %v2091 = vmul.f32 %v1905, %v2059
        %v2092 = vmul.f32 %v1907, %v2060
        %v2093 = vmul.f32 %v1909, %v2061
        %v2094 = vmul.f32 %v1911, %v2062
        %v2095 = vmul.f32 %v1913, %v2063
        %v2096 = vmul.f32 %v1915, %v2064
        %v2097 = vmul.f32 %v1917, %v2065
        %v2098 = vmul.f32 %v1919, %v2066
        %v2099 = vmul.f32 %v1921, %v2067
        %v2100 = vmul.f32 %v1923, %v2068
        %v2101 = vmul.f32 %v1925, %v2069
        %v2102 = vmul.f32 %v1927, %v2070
        %v2103 = vmul.f32 %v1929, %v2071
        %v2104 = vmul.f32 %v1931, %v2072
        %v2105 = vmul.f32 %v1933, %v2073
        %v2106 = vmul.f32 %v1935, %v2074
        %v2107 = vmul.f32 %v1937, %v2075
        %v2108 = vmul.f32 %v1939, %v2076
        %v2109 = vmul.f32 %v1941, %v2077
        %v2110 = vmul.f32 %v1943, %v2078
        %v2111 = vmul.f32 %v1945, %v2079
        %v2112 = vmul.f32 %v1947, %v2080
        %v2113 = vmul.f32 %v1949, %v2081
        %v2114 = vmul.f32 %v1951, %v2082
        %v2115 = vmul.f32 %v1953, %v2083
        %v2116 = vmul.f32 %v1955, %v2084
        %v2117 = vmul.f32 %v1957, %v2085
        %v2118 = vpack.c.bf16 %v2086, %v2086
        %v2119 = vpack.c.bf16 %v2087, %v2087
        %v2120 = vpack.c.bf16 %v2088, %v2088
        %v2121 = vpack.c.bf16 %v2089, %v2089
        %v2122 = vpack.c.bf16 %v2090, %v2090
        %v2123 = vpack.c.bf16 %v2091, %v2091
        %v2124 = vpack.c.bf16 %v2092, %v2092
        %v2125 = vpack.c.bf16 %v2093, %v2093
        %v2126 = vpack.c.bf16 %v2094, %v2094
        %v2127 = vpack.c.bf16 %v2095, %v2095
        %v2128 = vpack.c.bf16 %v2096, %v2096
        %v2129 = vpack.c.bf16 %v2097, %v2097
        %v2130 = vpack.c.bf16 %v2098, %v2098
        %v2131 = vpack.c.bf16 %v2099, %v2099
        %v2132 = vpack.c.bf16 %v2100, %v2100
        %v2133 = vpack.c.bf16 %v2101, %v2101
        %v2134 = vpack.c.bf16 %v2102, %v2102
        %v2135 = vpack.c.bf16 %v2103, %v2103
        %v2136 = vpack.c.bf16 %v2104, %v2104
        %v2137 = vpack.c.bf16 %v2105, %v2105
        %v2138 = vpack.c.bf16 %v2106, %v2106
        %v2139 = vpack.c.bf16 %v2107, %v2107
        %v2140 = vpack.c.bf16 %v2108, %v2108
        %v2141 = vpack.c.bf16 %v2109, %v2109
        %v2142 = vpack.c.bf16 %v2110, %v2110
        %v2143 = vpack.c.bf16 %v2111, %v2111
        %v2144 = vpack.c.bf16 %v2112, %v2112
        %v2145 = vpack.c.bf16 %v2113, %v2113
        %v2146 = vpack.c.bf16 %v2114, %v2114
        %v2147 = vpack.c.bf16 %v2115, %v2115
        %v2148 = vpack.c.bf16 %v2116, %v2116
        %v2149 = vpack.c.bf16 %v2117, %v2117
        %v2158 = vunpack.c.l.b16 %v2118
        %v2159 = vunpack.c.l.b16 %v2119
        %v2160 = vunpack.c.l.b16 %v2120
        %v2161 = vunpack.c.l.b16 %v2121
        %v2162 = vunpack.c.l.b16 %v2122
        %v2163 = vunpack.c.l.b16 %v2123
        %v2164 = vunpack.c.l.b16 %v2124
        %v2165 = vunpack.c.l.b16 %v2125
        %v2166 = vpack.c.b16 %v2159, %v2158
        %v2167 = vpack.c.b16 %v2161, %v2160
        %v2168 = vpack.c.b16 %v2163, %v2162
        %v2169 = vpack.c.b16 %v2165, %v2164
        %v2178 = vunpack.c.l.b16 %v1342
        %v2179 = vunpack.c.l.b16 %v1343
        %v2180 = vunpack.c.l.b16 %v1344
        %v2181 = vunpack.c.l.b16 %v1345
        %v2182 = vunpack.c.l.b16 %v1346
        %v2183 = vunpack.c.l.b16 %v1347
        %v2184 = vunpack.c.l.b16 %v1348
        %v2185 = vunpack.c.l.b16 %v1349
        %v2186 = vpack.c.b16 %v2179, %v2178
        %v2187 = vpack.c.b16 %v2181, %v2180
        %v2188 = vpack.c.b16 %v2183, %v2182
        %v2189 = vpack.c.b16 %v2185, %v2184
        %v2195 = vsel %vm1402, %v2166, 0
        %v2198 = vsel %vm1402, %v2167, 0
        %v2201 = vsel %vm1402, %v2168, 0
        %v2204 = vsel %vm1402, %v2169, 0
        %2206 = vmatpush.bf16.msra.mxu0 0
        %2207 = vmatpush.bf16.msra.mxu0 0
        %2208 = vmatpush.bf16.msra.mxu0 0
        %2209 = vmatpush.bf16.msra.mxu0 0
        %2210 = vmatpush.bf16.msra.mxu0 %v2189
        %2211 = vmatpush.bf16.msra.mxu0 %v2188
        %2212 = vmatpush.bf16.msra.mxu0 %v2187
        %2213 = vmatpush.bf16.msra.mxu0 %v2186
        %2214 = vmatmul.bf16.gmra.mxu0 %v2195
        %v2215 = vpop.f32.mrf.mxu0
        %v2216 = vadd.f32 0.0, %v2215
        %v2217 = vpop.f32.mrf.mxu0
        %v2218 = vadd.f32 0.0, %v2217
        %2219 = vmatmul.bf16.gmra.mxu0 %v2198
        %v2220 = vpop.f32.mrf.mxu0
        %v2221 = vadd.f32 0.0, %v2220
        %v2222 = vpop.f32.mrf.mxu0
        %v2223 = vadd.f32 0.0, %v2222
        %2224 = vmatmul.bf16.gmra.mxu0 %v2201
        %v2225 = vpop.f32.mrf.mxu0
        %v2226 = vadd.f32 0.0, %v2225
        %v2227 = vpop.f32.mrf.mxu0
        %v2228 = vadd.f32 0.0, %v2227
        %2229 = vmatmul.bf16.gmra.mxu0 %v2204
        %v2230 = vpop.f32.mrf.mxu0
        %v2231 = vadd.f32 0.0, %v2230
        %v2232 = vpop.f32.mrf.mxu0
        %v2233 = vadd.f32 0.0, %v2232
        %2234 = vdwg.mxu0
        %v2243 = vunpack.c.l.b16 %v2126
        %v2244 = vunpack.c.l.b16 %v2127
        %v2245 = vunpack.c.l.b16 %v2128
        %v2246 = vunpack.c.l.b16 %v2129
        %v2247 = vunpack.c.l.b16 %v2130
        %v2248 = vunpack.c.l.b16 %v2131
        %v2249 = vunpack.c.l.b16 %v2132
        %v2250 = vunpack.c.l.b16 %v2133
        %v2251 = vpack.c.b16 %v2244, %v2243
        %v2252 = vpack.c.b16 %v2246, %v2245
        %v2253 = vpack.c.b16 %v2248, %v2247
        %v2254 = vpack.c.b16 %v2250, %v2249
        %v2263 = vunpack.c.l.b16 %v1350
        %v2264 = vunpack.c.l.b16 %v1351
        %v2265 = vunpack.c.l.b16 %v1352
        %v2266 = vunpack.c.l.b16 %v1353
        %v2267 = vunpack.c.l.b16 %v1354
        %v2268 = vunpack.c.l.b16 %v1355
        %v2269 = vunpack.c.l.b16 %v1356
        %v2270 = vunpack.c.l.b16 %v1357
        %v2271 = vpack.c.b16 %v2264, %v2263
        %v2272 = vpack.c.b16 %v2266, %v2265
        %v2273 = vpack.c.b16 %v2268, %v2267
        %v2274 = vpack.c.b16 %v2270, %v2269
        %v2280 = vsel %vm1402, %v2251, 0
        %v2283 = vsel %vm1402, %v2252, 0
        %v2286 = vsel %vm1402, %v2253, 0
        %v2289 = vsel %vm1402, %v2254, 0
        %2291 = vmatpush.bf16.msra.mxu0 0
        %2292 = vmatpush.bf16.msra.mxu0 0
        %2293 = vmatpush.bf16.msra.mxu0 0
        %2294 = vmatpush.bf16.msra.mxu0 0
        %2295 = vmatpush.bf16.msra.mxu0 %v2274
        %2296 = vmatpush.bf16.msra.mxu0 %v2273
        %2297 = vmatpush.bf16.msra.mxu0 %v2272
        %2298 = vmatpush.bf16.msra.mxu0 %v2271
        %2299 = vmatmul.bf16.gmra.mxu0 %v2280
        %v2300 = vpop.f32.mrf.mxu0
        %v2301 = vadd.f32 0.0, %v2300
        %v2302 = vpop.f32.mrf.mxu0
        %v2303 = vadd.f32 0.0, %v2302
        %2304 = vmatmul.bf16.gmra.mxu0 %v2283
        %v2305 = vpop.f32.mrf.mxu0
        %v2306 = vadd.f32 0.0, %v2305
        %v2307 = vpop.f32.mrf.mxu0
        %v2308 = vadd.f32 0.0, %v2307
        %2309 = vmatmul.bf16.gmra.mxu0 %v2286
        %v2310 = vpop.f32.mrf.mxu0
        %v2311 = vadd.f32 0.0, %v2310
        %v2312 = vpop.f32.mrf.mxu0
        %v2313 = vadd.f32 0.0, %v2312
        %2314 = vmatmul.bf16.gmra.mxu0 %v2289
        %v2315 = vpop.f32.mrf.mxu0
        %v2316 = vadd.f32 0.0, %v2315
        %v2317 = vpop.f32.mrf.mxu0
        %v2318 = vadd.f32 0.0, %v2317
        %2319 = vdwg.mxu0
        %v2328 = vunpack.c.l.b16 %v2134
        %v2329 = vunpack.c.l.b16 %v2135
        %v2330 = vunpack.c.l.b16 %v2136
        %v2331 = vunpack.c.l.b16 %v2137
        %v2332 = vunpack.c.l.b16 %v2138
        %v2333 = vunpack.c.l.b16 %v2139
        %v2334 = vunpack.c.l.b16 %v2140
        %v2335 = vunpack.c.l.b16 %v2141
        %v2336 = vpack.c.b16 %v2329, %v2328
        %v2337 = vpack.c.b16 %v2331, %v2330
        %v2338 = vpack.c.b16 %v2333, %v2332
        %v2339 = vpack.c.b16 %v2335, %v2334
        %v2348 = vunpack.c.l.b16 %v1358
        %v2349 = vunpack.c.l.b16 %v1359
        %v2350 = vunpack.c.l.b16 %v1360
        %v2351 = vunpack.c.l.b16 %v1361
        %v2352 = vunpack.c.l.b16 %v1362
        %v2353 = vunpack.c.l.b16 %v1363
        %v2354 = vunpack.c.l.b16 %v1364
        %v2355 = vunpack.c.l.b16 %v1365
        %v2356 = vpack.c.b16 %v2349, %v2348
        %v2357 = vpack.c.b16 %v2351, %v2350
        %v2358 = vpack.c.b16 %v2353, %v2352
        %v2359 = vpack.c.b16 %v2355, %v2354
        %v2365 = vsel %vm1402, %v2336, 0
        %v2368 = vsel %vm1402, %v2337, 0
        %v2371 = vsel %vm1402, %v2338, 0
        %v2374 = vsel %vm1402, %v2339, 0
        %2376 = vmatpush.bf16.msra.mxu0 0
        %2377 = vmatpush.bf16.msra.mxu0 0
        %2378 = vmatpush.bf16.msra.mxu0 0
        %2379 = vmatpush.bf16.msra.mxu0 0
        %2380 = vmatpush.bf16.msra.mxu0 %v2359
        %2381 = vmatpush.bf16.msra.mxu0 %v2358
        %2382 = vmatpush.bf16.msra.mxu0 %v2357
        %2383 = vmatpush.bf16.msra.mxu0 %v2356
        %2384 = vmatmul.bf16.gmra.mxu0 %v2365
        %v2385 = vpop.f32.mrf.mxu0
        %v2386 = vadd.f32 0.0, %v2385
        %v2387 = vpop.f32.mrf.mxu0
        %v2388 = vadd.f32 0.0, %v2387
        %2389 = vmatmul.bf16.gmra.mxu0 %v2368
        %v2390 = vpop.f32.mrf.mxu0
        %v2391 = vadd.f32 0.0, %v2390
        %v2392 = vpop.f32.mrf.mxu0
        %v2393 = vadd.f32 0.0, %v2392
        %2394 = vmatmul.bf16.gmra.mxu0 %v2371
        %v2395 = vpop.f32.mrf.mxu0
        %v2396 = vadd.f32 0.0, %v2395
        %v2397 = vpop.f32.mrf.mxu0
        %v2398 = vadd.f32 0.0, %v2397
        %2399 = vmatmul.bf16.gmra.mxu0 %v2374
        %v2400 = vpop.f32.mrf.mxu0
        %v2401 = vadd.f32 0.0, %v2400
        %v2402 = vpop.f32.mrf.mxu0
        %v2403 = vadd.f32 0.0, %v2402
        %2404 = vdwg.mxu0
        %v2413 = vunpack.c.l.b16 %v2142
        %v2414 = vunpack.c.l.b16 %v2143
        %v2415 = vunpack.c.l.b16 %v2144
        %v2416 = vunpack.c.l.b16 %v2145
        %v2417 = vunpack.c.l.b16 %v2146
        %v2418 = vunpack.c.l.b16 %v2147
        %v2419 = vunpack.c.l.b16 %v2148
        %v2420 = vunpack.c.l.b16 %v2149
        %v2421 = vpack.c.b16 %v2414, %v2413
        %v2422 = vpack.c.b16 %v2416, %v2415
        %v2423 = vpack.c.b16 %v2418, %v2417
        %v2424 = vpack.c.b16 %v2420, %v2419
        %v2433 = vunpack.c.l.b16 %v1366
        %v2434 = vunpack.c.l.b16 %v1367
        %v2435 = vunpack.c.l.b16 %v1368
        %v2436 = vunpack.c.l.b16 %v1369
        %v2437 = vunpack.c.l.b16 %v1370
        %v2438 = vunpack.c.l.b16 %v1371
        %v2439 = vunpack.c.l.b16 %v1372
        %v2440 = vunpack.c.l.b16 %v1373
        %v2441 = vpack.c.b16 %v2434, %v2433
        %v2442 = vpack.c.b16 %v2436, %v2435
        %v2443 = vpack.c.b16 %v2438, %v2437
        %v2444 = vpack.c.b16 %v2440, %v2439
        %v2450 = vsel %vm1402, %v2421, 0
        %v2453 = vsel %vm1402, %v2422, 0
        %v2456 = vsel %vm1402, %v2423, 0
        %v2459 = vsel %vm1402, %v2424, 0
        %2461 = vmatpush.bf16.msra.mxu0 0
        %2462 = vmatpush.bf16.msra.mxu0 0
        %2463 = vmatpush.bf16.msra.mxu0 0
        %2464 = vmatpush.bf16.msra.mxu0 0
        %2465 = vmatpush.bf16.msra.mxu0 %v2444
        %2466 = vmatpush.bf16.msra.mxu0 %v2443
        %2467 = vmatpush.bf16.msra.mxu0 %v2442
        %2468 = vmatpush.bf16.msra.mxu0 %v2441
        %2469 = vmatmul.bf16.gmra.mxu0 %v2450
        %v2470 = vpop.f32.mrf.mxu0
        %v2471 = vadd.f32 0.0, %v2470
        %v2472 = vpop.f32.mrf.mxu0
        %v2473 = vadd.f32 0.0, %v2472
        %2474 = vmatmul.bf16.gmra.mxu0 %v2453
        %v2475 = vpop.f32.mrf.mxu0
        %v2476 = vadd.f32 0.0, %v2475
        %v2477 = vpop.f32.mrf.mxu0
        %v2478 = vadd.f32 0.0, %v2477
        %2479 = vmatmul.bf16.gmra.mxu0 %v2456
        %v2480 = vpop.f32.mrf.mxu0
        %v2481 = vadd.f32 0.0, %v2480
        %v2482 = vpop.f32.mrf.mxu0
        %v2483 = vadd.f32 0.0, %v2482
        %2484 = vmatmul.bf16.gmra.mxu0 %v2459
        %v2485 = vpop.f32.mrf.mxu0
        %v2486 = vadd.f32 0.0, %v2485
        %v2487 = vpop.f32.mrf.mxu0
        %v2488 = vadd.f32 0.0, %v2487
        %2489 = vdwg.mxu0
        %2490 = vst.msk [vmem:[%s164] sm:$0xff] %vm1402, %v2216
        %2491 = vst.msk [vmem:[%s164 + $0x8] sm:$0xff] %vm1402, %v2218
        %2492 = vst.msk [vmem:[%s164 + $0x10] sm:$0xff] %vm1402, %v2221
        %2493 = vst.msk [vmem:[%s164 + $0x18] sm:$0xff] %vm1402, %v2223
        %2494 = vst.msk [vmem:[%s164 + $0x20] sm:$0xff] %vm1402, %v2226
        %2495 = vst.msk [vmem:[%s164 + $0x28] sm:$0xff] %vm1402, %v2228
        %2496 = vst.msk [vmem:[%s164 + $0x30] sm:$0xff] %vm1402, %v2231
        %2497 = vst.msk [vmem:[%s164 + $0x38] sm:$0xff] %vm1402, %v2233
        %2498 = vst.msk [vmem:[%s164 + $0x40] sm:$0xff] %vm1402, %v2301
        %2499 = vst.msk [vmem:[%s164 + $0x48] sm:$0xff] %vm1402, %v2303
        %2500 = vst.msk [vmem:[%s164 + $0x50] sm:$0xff] %vm1402, %v2306
        %2501 = vst.msk [vmem:[%s164 + $0x58] sm:$0xff] %vm1402, %v2308
        %2502 = vst.msk [vmem:[%s164 + $0x60] sm:$0xff] %vm1402, %v2311
        %2503 = vst.msk [vmem:[%s164 + $0x68] sm:$0xff] %vm1402, %v2313
        %2504 = vst.msk [vmem:[%s164 + $0x70] sm:$0xff] %vm1402, %v2316
        %2505 = vst.msk [vmem:[%s164 + $0x78] sm:$0xff] %vm1402, %v2318
        %2506 = vst.msk [vmem:[%s164 + $0x80] sm:$0xff] %vm1402, %v2386
        %2507 = vst.msk [vmem:[%s164 + $0x88] sm:$0xff] %vm1402, %v2388
        %2508 = vst.msk [vmem:[%s164 + $0x90] sm:$0xff] %vm1402, %v2391
        %2509 = vst.msk [vmem:[%s164 + $0x98] sm:$0xff] %vm1402, %v2393
        %2510 = vst.msk [vmem:[%s164 + $0xa0] sm:$0xff] %vm1402, %v2396
        %2511 = vst.msk [vmem:[%s164 + $0xa8] sm:$0xff] %vm1402, %v2398
        %2512 = vst.msk [vmem:[%s164 + $0xb0] sm:$0xff] %vm1402, %v2401
        %2513 = vst.msk [vmem:[%s164 + $0xb8] sm:$0xff] %vm1402, %v2403
        %2514 = vst.msk [vmem:[%s164 + $0xc0] sm:$0xff] %vm1402, %v2471
        %2515 = vst.msk [vmem:[%s164 + $0xc8] sm:$0xff] %vm1402, %v2473
        %2516 = vst.msk [vmem:[%s164 + $0xd0] sm:$0xff] %vm1402, %v2476
        %2517 = vst.msk [vmem:[%s164 + $0xd8] sm:$0xff] %vm1402, %v2478
        %2518 = vst.msk [vmem:[%s164 + $0xe0] sm:$0xff] %vm1402, %v2481
        %2519 = vst.msk [vmem:[%s164 + $0xe8] sm:$0xff] %vm1402, %v2483
        %2520 = vst.msk [vmem:[%s164 + $0xf0] sm:$0xff] %vm1402, %v2486
        %2521 = vst.msk [vmem:[%s164 + $0xf8] sm:$0xff] %vm1402, %v2488
        %s2522 = sand.u32 %s74, 1
        %s2523 = scalar_lea.sflag [#allocation4], %s2522
        %s2524 = sand.u32 %s74, 1
        %s2525 = smul.addr %s2524, 256
        %s2526 = scalar_lea.vmem [#allocation5], %s2525
        // Predicated region
        $region33: #{tpu_custom_call.1} parent=27 // pred_check
          %p2527 = pneg %p84
        $region34: #{tpu_custom_call.1} parent=27 // pred_check_branch
          %2529 = sbr.rel (%p2527) target = $region36
        $region35: #{tpu_custom_call.1} parent=27 // pred_region
          %s2530 = smul.u32 4, %s19
          %2532 = vsyncadd %s2523, 0
          %s2533 = smul.addr %s2530, 8
          %s2534 = smul.addr %s2533, 8
          %s2535 = scalar_lea.hbm %s2, %s2534
          %s2536 = sshll.u32 %s2526, 4
          %s2537 = int_to_ptr.vmem [resolvable:$true] %s2536
          %s2538 = sshll.u32 %s2535, 4
          %s2539 = int_to_ptr.hbm [resolvable:$true] %s2538
          %2544 = dma.vmem_to_hbm [thread:$0]  %s2537, 4096, %s2539, %s2523, 128, 128, 8
        $region36: #{tpu_custom_call.1} parent=27 // pred_fallthru
          _
      $region28: #{tpu_custom_call.1} parent=5 // pred_fallthru
        _
      %p2545 = scmp.le.s32.totalorder 2, %s14
      // Predicated region
      $region37: #{tpu_custom_call.1} parent=5 // pred_check
        %p2546 = pneg %p2545
      $region38: #{tpu_custom_call.1} parent=5 // pred_check_branch
        %2548 = sbr.rel (%p2546) target = $region40
      $region39: #{tpu_custom_call.1} parent=5 // pred_region
        %s2549 = ssub.s32 %s14, 2
        // Predicated region
        $region41: #{tpu_custom_call.1} parent=39 // pred_check
          %p2550 = pneg %p90
        $region42: #{tpu_custom_call.1} parent=39 // pred_check_branch
          %2552 = sbr.rel (%p2550) target = $region44
        $region43: #{tpu_custom_call.1} parent=39 // pred_region
          %s2553 = sand.u32 %s75, 1
          %s2554 = scalar_lea.sflag [#allocation4], %s2553
          %s2555 = sand.u32 %s75, 1
          %s2556 = smul.addr %s2555, 256
          %s2557 = scalar_lea.vmem [#allocation5], %s2556
          %2559 = dma.done %s2554, 4096
        $region44: #{tpu_custom_call.1} parent=39 // pred_fallthru
          _
      $region40: #{tpu_custom_call.1} parent=5 // pred_fallthru
        _
    $region6: #{tpu_custom_call.1} parent=1 // loop_footer
      %s18 = sadd.s32 1, %s14
    $region7: #{tpu_custom_call.1} parent=1 // loop_footer_branch
      %13 = sbr.rel target = $region3
    $region8: #{tpu_custom_call.1} parent=1 // loop_exit
      _
    %2560 = vsyncpa [#allocation3], 1
    %s2561 = scalar_lea.sflag [#allocation3], 1
    %2562 = vsyncpa %s2561, 1
    %2563 = vsyncpa [#allocation4], 1
    %s2564 = scalar_lea.sflag [#allocation4], 1
    %2565 = vsyncpa %s2564, 1

</llo_original>
